<compile_context>
chip_gen: v7x
topology: tpu7x:2x2x1
jax: 0.10.0
libtpu: 0.0.40
codegen_flags: <defaults>
</compile_context>

<pallas_src>
import functools

import jax
import jax.numpy as jnp
from jax.experimental import pallas as pl
from jax.experimental.pallas import tpu as pltpu


def _leaky(v):
    # LeakyReLU(0.2): for slope in (0,1), max(v, 0.2*v) == where(v>=0, v, 0.2*v).
    return jnp.maximum(v, 0.2 * v)


def residual_stack_kernel(x_ref, wp_ref, wm_ref, wn_ref, b1_ref, w2_ref, b2_ref,
                          o_ref, *, seq_len):
    # x_ref:  (C, N)        N = B_TILE * seq_len samples, channels-first, lane-dense
    # wp/wm/wn_ref: (NL, H, C)  conv1 taps for h[l-1] / h[l] / h[l+1]
    # b1_ref: (NL, H, 1)
    # w2_ref: (NL, C, H)    conv2 (1x1) weights
    # b2_ref: (NL, C, 1)
    # o_ref:  (C, N)
    x = x_ref[...].astype(jnp.float32)                      # (C, N)
    C, N = x.shape
    num_layers = wp_ref.shape[0]

    # Per-sample boundary masks (each sample occupies a contiguous run of
    # seq_len columns).  Computed once, reused by every layer.
    pos = jax.lax.broadcasted_iota(jnp.int32, (C, N), 1) % seq_len
    first_col = pos == 0
    last_col = pos == (seq_len - 1)

    # Static unroll: num_residual_layers is small (<=4).  Switch to lax.fori_loop
    # with dynamic w*_ref[i] indexing if it ever grows.
    for i in range(num_layers):
        h = _leaky(x)                                       # (C, N)

        # Shifted taps via XLU lane rotations + per-sample boundary zero masks.
        #   h_prev[:, l] = h[:, l-1] (0 at sample start)
        #   h_next[:, l] = h[:, l+1] (0 at sample end)
        h_prev = jnp.where(first_col, 0.0, pltpu.roll(h, shift=1, axis=1))
        h_next = jnp.where(last_col, 0.0, pltpu.roll(h, shift=N - 1, axis=1))

        # conv1 (k=3, pad=1) as three per-tap matmuls accumulated in f32
        # (no im2col concat -> no extra VMEM round-trip); bias folded in.
        z = (jnp.dot(wp_ref[i], h_prev, preferred_element_type=jnp.float32)
             + jnp.dot(wm_ref[i], h, preferred_element_type=jnp.float32)
             + jnp.dot(wn_ref[i], h_next, preferred_element_type=jnp.float32)
             + b1_ref[i])                                   # (H, N)
        z = _leaky(z)

        # conv2 (k=1): plain matmul; bias folded in.
        h2 = jnp.dot(w2_ref[i], z,
                     preferred_element_type=jnp.float32) + b2_ref[i]   # (C, N)

        if i == num_layers - 1:
            # Fuse residual add + final LeakyReLU + lane-dense store.
            o_ref[...] = _leaky(x + h2).astype(o_ref.dtype)
        else:
            x = x + h2


def residual_stack(x_ncl, w1_pt, b1_pt, w2_pt, b2_pt, *, b_tile=None):
    """x_ncl: (B, C, L) exactly like the PyTorch Conv1d input.  Returns (B, C, L).

    Weights are passed in PyTorch convention (stacked over layers):
      w1_pt: (NL, H, C, 3)  = conv_one.weight,  b1_pt: (NL, H)
      w2_pt: (NL, Co, H, 1) = conv_two.weight,  b2_pt: (NL, Co)
    """
    B, C, L = x_ncl.shape
    NL, H, C_in, K = w1_pt.shape
    assert C_in == C and K == 3, "conv_one weight must be (NL, H, C, 3)"
    assert w2_pt.shape == (NL, C, H, 1), (
        "residual add requires hidden_dim == in_channels")

    # --- batch-tile chooser -------------------------------------------------
    # Largest divisor of B whose activation block stays ~<= 2 MiB, preferring
    # >= 2 grid steps so v7x can shard across both TensorCores.
    if b_tile is None:
        cap = max(1, (2 * 1024 * 1024) // (4 * C * L))
        b_tile = 1
        for d in range(1, B + 1):
            if B % d == 0 and d <= cap and (B // d >= 2 or B == 1):
                b_tile = d
    assert B % b_tile == 0, "b_tile must divide batch size"
    n_cols = b_tile * L
    grid = (B // b_tile,)

    # --- layout plumbing (outside the kernel) -------------------------------
    # One-time transpose to channels-first, batch folded into the lane axis.
    # NOTE: keep L a multiple of 128 (or pad upstream) so activations and the
    # output store stay lane-dense (unmasked vst).
    x_flat = jnp.transpose(x_ncl, (1, 0, 2)).reshape(C, B * L).astype(jnp.float32)

    wp = w1_pt[..., 0].astype(jnp.float32)            # (NL, H, C)  tap l-1
    wm = w1_pt[..., 1].astype(jnp.float32)            # (NL, H, C)  tap l
    wn = w1_pt[..., 2].astype(jnp.float32)            # (NL, H, C)  tap l+1
    w2f = w2_pt[..., 0].astype(jnp.float32)           # (NL, C, H)
    b1c = b1_pt[..., None].astype(jnp.float32)        # (NL, H, 1)
    b2c = b2_pt[..., None].astype(jnp.float32)        # (NL, C, 1)

    # Advisory cost estimate for XLA scheduling around this small kernel.
    flops = 2 * NL * B * L * (H * 3 * C + C * H)
    bytes_accessed = 4 * (2 * B * C * L + NL * (3 * H * C + C * H + H + C))

    out_flat = pl.pallas_call(
        functools.partial(residual_stack_kernel, seq_len=L),
        out_shape=jax.ShapeDtypeStruct((C, B * L), jnp.float32),
        grid=grid,
        in_specs=[
            # B_TILE samples per grid step; full L per sample so k=3 needs no halo.
            pl.BlockSpec((C, n_cols), lambda b: (0, b)),
            # Small weights: whole-array blocks, constant index map (stay resident).
            pl.BlockSpec((NL, H, C), lambda b: (0, 0, 0)),
            pl.BlockSpec((NL, H, C), lambda b: (0, 0, 0)),
            pl.BlockSpec((NL, H, C), lambda b: (0, 0, 0)),
            pl.BlockSpec((NL, H, 1), lambda b: (0, 0, 0)),
            pl.BlockSpec((NL, C, H), lambda b: (0, 0, 0)),
            pl.BlockSpec((NL, C, 1), lambda b: (0, 0, 0)),
        ],
        out_specs=pl.BlockSpec((C, n_cols), lambda b: (0, b)),
        compiler_params=pltpu.CompilerParams(
            dimension_semantics=("parallel",),        # 2-TC sharding on v7x
            vmem_limit_bytes=48 * 1024 * 1024,        # < 64 MiB physical on v7x
        ),
        cost_estimate=pl.CostEstimate(
            flops=flops, transcendentals=0, bytes_accessed=bytes_accessed),
    )(x_flat, wp, wm, wn, b1c, w2f, b2c)

    return out_flat.reshape(C, B, L).transpose(1, 0, 2)


def _reference(x_ncl, w1_pt, b1_pt, w2_pt, b2_pt):
    """Pure-JAX reference using lax.conv_general_dilated (PyTorch Conv1d semantics)."""
    prec = jax.lax.Precision.HIGHEST
    num_layers = w1_pt.shape[0]
    acc = x_ncl.astype(jnp.float32)
    for i in range(num_layers):
        h = _leaky(acc)
        h = jax.lax.conv_general_dilated(
            h, w1_pt[i], window_strides=(1,), padding=[(1, 1)],
            dimension_numbers=("NCH", "OIH", "NCH"), precision=prec)
        h = _leaky(h + b1_pt[i][None, :, None])
        h = jax.lax.conv_general_dilated(
            h, w2_pt[i], window_strides=(1,), padding=[(0, 0)],
            dimension_numbers=("NCH", "OIH", "NCH"), precision=prec)
        h = h + b2_pt[i][None, :, None]
        acc = acc + h
    return _leaky(acc)


if __name__ == "__main__":
    # Module hyperparameters (hidden_dim must equal in_channels for the residual add).
    in_channels = 32
    hidden_dim = 32
    num_residual_hidden = 16
    num_residual_layers = 2

    B, L = 4, 128   # L multiple of 128 -> lane-dense activations and output stores

    key = jax.random.PRNGKey(0)
    kx, k1, k2, k3, k4 = jax.random.split(key, 5)

    # PyTorch-convention parameters, stacked over layers:
    #   conv_one.weight (H, C, 3), conv_one.bias (H,)
    #   conv_two.weight (C, H, 1), conv_two.bias (C,)
    w1 = jax.random.normal(
        k1, (num_residual_layers, num_residual_hidden, in_channels, 3),
        dtype=jnp.float32) * 0.1
    b1 = jax.random.normal(
        k2, (num_residual_layers, num_residual_hidden), dtype=jnp.float32) * 0.1
    w2 = jax.random.normal(
        k3, (num_residual_layers, hidden_dim, num_residual_hidden, 1),
        dtype=jnp.float32) * 0.1
    b2 = jax.random.normal(
        k4, (num_residual_layers, hidden_dim), dtype=jnp.float32) * 0.1

    x = jax.random.normal(kx, (B, in_channels, L), dtype=jnp.float32)   # NCL

    out = jax.block_until_ready(residual_stack(x, w1, b1, w2, b2))
    ref = jax.block_until_ready(_reference(x, w1, b1, w2, b2))

    assert out.shape == (B, in_channels, L)
    assert jnp.allclose(out, ref, atol=2e-4, rtol=2e-4), "mismatch vs reference"

    print("KERNEL_OK")
</pallas_src>

<mosaic_0001>
module attributes {stable_mosaic.version = 11 : i64} {
  func.func @residual_stack_kernel(%arg0: i32, %arg1: memref<32x256xf32, #tpu.memory_space<vmem>>, %arg2: memref<2x16x32xf32, #tpu.memory_space<vmem>>, %arg3: memref<2x16x32xf32, #tpu.memory_space<vmem>>, %arg4: memref<2x16x32xf32, #tpu.memory_space<vmem>>, %arg5: memref<2x16x1xf32, #tpu.memory_space<vmem>>, %arg6: memref<2x32x16xf32, #tpu.memory_space<vmem>>, %arg7: memref<2x32x1xf32, #tpu.memory_space<vmem>>, %arg8: memref<32x256xf32, #tpu.memory_space<vmem>>) attributes {dimension_semantics = [#tpu.dimension_semantics<parallel>], iteration_bounds = array<i64: 2>, scalar_prefetch = 0 : i64, scratch_operands = 0 : i64, tpu.core_type = #tpu.core_type<tc>, window_params = [{transform_indices = @transform_0, window_bounds = array<i64: 32, 256>}, {pipeline_mode = #tpu.pipeline_mode<synchronous>, transform_indices = @transform_1, window_bounds = array<i64: 2, 16, 32>}, {pipeline_mode = #tpu.pipeline_mode<synchronous>, transform_indices = @transform_2, window_bounds = array<i64: 2, 16, 32>}, {pipeline_mode = #tpu.pipeline_mode<synchronous>, transform_indices = @transform_3, window_bounds = array<i64: 2, 16, 32>}, {pipeline_mode = #tpu.pipeline_mode<synchronous>, transform_indices = @transform_4, window_bounds = array<i64: 2, 16, 1>}, {pipeline_mode = #tpu.pipeline_mode<synchronous>, transform_indices = @transform_5, window_bounds = array<i64: 2, 32, 16>}, {pipeline_mode = #tpu.pipeline_mode<synchronous>, transform_indices = @transform_6, window_bounds = array<i64: 2, 32, 1>}, {transform_indices = @transform_7, window_bounds = array<i64: 32, 256>}]} {
    %c0 = arith.constant 0 : index
    %c0_0 = arith.constant 0 : index
    %0 = vector.load %arg1[%c0, %c0_0] : memref<32x256xf32, #tpu.memory_space<vmem>>, vector<32x256xf32>
    %1 = tpu.iota {dimensions = array<i32: 1>} : vector<32x256xi32>
    %c128_i32 = arith.constant 128 : i32
    %c0_i32 = arith.constant 0 : i32
    %2 = arith.cmpi eq, %c128_i32, %c0_i32 : i32
    %c1_i32 = arith.constant 1 : i32
    %3 = arith.select %2, %c1_i32, %c128_i32 : i32
    %4 = vector.broadcast %3 : i32 to vector<32x256xi32>
    %5 = arith.remsi %1, %4 : vector<32x256xi32>
    %c0_i32_1 = arith.constant 0 : i32
    %6 = vector.broadcast %c0_i32_1 : i32 to vector<32x256xi32>
    %7 = arith.cmpi ne, %5, %6 : vector<32x256xi32>
    %c0_i32_2 = arith.constant 0 : i32
    %8 = vector.broadcast %c0_i32_2 : i32 to vector<32x256xi32>
    %9 = arith.cmpi slt, %5, %8 : vector<32x256xi32>
    %c0_i32_3 = arith.constant 0 : i32
    %10 = arith.cmpi slt, %3, %c0_i32_3 : i32
    %11 = vector.broadcast %10 : i1 to vector<32x256xi1>
    %12 = vector.broadcast %11 : vector<32x256xi1> to vector<32x256xi1>
    %13 = arith.xori %9, %12 : vector<32x256xi1>
    %14 = arith.andi %13, %7 : vector<32x256xi1>
    %15 = vector.broadcast %3 : i32 to vector<32x256xi32>
    %16 = arith.addi %5, %15 : vector<32x256xi32>
    %17 = arith.select %14, %16, %5 : vector<32x256xi1>, vector<32x256xi32>
    %c0_i32_4 = arith.constant 0 : i32
    %18 = vector.broadcast %c0_i32_4 : i32 to vector<32x256xi32>
    %19 = arith.cmpi eq, %17, %18 : vector<32x256xi32>
    %c127_i32 = arith.constant 127 : i32
    %20 = vector.broadcast %c127_i32 : i32 to vector<32x256xi32>
    %21 = arith.cmpi eq, %17, %20 : vector<32x256xi32>
    %cst = arith.constant 2.000000e-01 : f32
    %22 = vector.broadcast %cst : f32 to vector<32x256xf32>
    %23 = arith.mulf %22, %0 : vector<32x256xf32>
    %24 = arith.maximumf %0, %23 : vector<32x256xf32>
    %c1_i32_5 = arith.constant 1 : i32
    %25 = tpu.dynamic_rotate %24 by %c1_i32_5 dim 1 : vector<32x256xf32>, i32 -> vector<32x256xf32>
    %cst_6 = arith.constant 0.000000e+00 : f32
    %26 = vector.broadcast %cst_6 : f32 to vector<32x256xf32>
    %27 = arith.select %19, %26, %25 : vector<32x256xi1>, vector<32x256xf32>
    %c255_i32 = arith.constant 255 : i32
    %28 = tpu.dynamic_rotate %24 by %c255_i32 dim 1 : vector<32x256xf32>, i32 -> vector<32x256xf32>
    %cst_7 = arith.constant 0.000000e+00 : f32
    %29 = vector.broadcast %cst_7 : f32 to vector<32x256xf32>
    %30 = arith.select %21, %29, %28 : vector<32x256xi1>, vector<32x256xf32>
    %c0_8 = arith.constant 0 : index
    %c0_9 = arith.constant 0 : index
    %c0_10 = arith.constant 0 : index
    %31 = vector.load %arg2[%c0_8, %c0_9, %c0_10] : memref<2x16x32xf32, #tpu.memory_space<vmem>>, vector<1x16x32xf32>
    %32 = vector.shape_cast %31 : vector<1x16x32xf32> to vector<16x32xf32>
    %cst_11 = arith.constant dense<0.000000e+00> : vector<16x256xf32>
    %33 = tpu.matmul %32, %27, %cst_11 {dimension_numbers = #tpu.dot_dimension_numbers<[1], [0], [0], [1], [0, 0, 1, 1], [], []>} : vector<16x32xf32>, vector<32x256xf32>, vector<16x256xf32> -> vector<16x256xf32>
    %c0_12 = arith.constant 0 : index
    %c0_13 = arith.constant 0 : index
    %c0_14 = arith.constant 0 : index
    %34 = vector.load %arg3[%c0_12, %c0_13, %c0_14] : memref<2x16x32xf32, #tpu.memory_space<vmem>>, vector<1x16x32xf32>
    %35 = vector.shape_cast %34 : vector<1x16x32xf32> to vector<16x32xf32>
    %cst_15 = arith.constant dense<0.000000e+00> : vector<16x256xf32>
    %36 = tpu.matmul %35, %24, %cst_15 {dimension_numbers = #tpu.dot_dimension_numbers<[1], [0], [0], [1], [0, 0, 1, 1], [], []>} : vector<16x32xf32>, vector<32x256xf32>, vector<16x256xf32> -> vector<16x256xf32>
    %37 = arith.addf %33, %36 : vector<16x256xf32>
    %c0_16 = arith.constant 0 : index
    %c0_17 = arith.constant 0 : index
    %c0_18 = arith.constant 0 : index
    %38 = vector.load %arg4[%c0_16, %c0_17, %c0_18] : memref<2x16x32xf32, #tpu.memory_space<vmem>>, vector<1x16x32xf32>
    %39 = vector.shape_cast %38 : vector<1x16x32xf32> to vector<16x32xf32>
    %cst_19 = arith.constant dense<0.000000e+00> : vector<16x256xf32>
    %40 = tpu.matmul %39, %30, %cst_19 {dimension_numbers = #tpu.dot_dimension_numbers<[1], [0], [0], [1], [0, 0, 1, 1], [], []>} : vector<16x32xf32>, vector<32x256xf32>, vector<16x256xf32> -> vector<16x256xf32>
    %41 = arith.addf %37, %40 : vector<16x256xf32>
    %c0_20 = arith.constant 0 : index
    %c0_21 = arith.constant 0 : index
    %c0_22 = arith.constant 0 : index
    %42 = vector.load %arg5[%c0_20, %c0_21, %c0_22] : memref<2x16x1xf32, #tpu.memory_space<vmem>>, vector<1x16x1xf32>
    %43 = vector.shape_cast %42 : vector<1x16x1xf32> to vector<16x1xf32>
    %44 = vector.broadcast %43 : vector<16x1xf32> to vector<16x256xf32>
    %45 = arith.addf %41, %44 : vector<16x256xf32>
    %cst_23 = arith.constant 2.000000e-01 : f32
    %46 = vector.broadcast %cst_23 : f32 to vector<16x256xf32>
    %47 = arith.mulf %46, %45 : vector<16x256xf32>
    %48 = arith.maximumf %45, %47 : vector<16x256xf32>
    %c0_24 = arith.constant 0 : index
    %c0_25 = arith.constant 0 : index
    %c0_26 = arith.constant 0 : index
    %49 = vector.load %arg6[%c0_24, %c0_25, %c0_26] : memref<2x32x16xf32, #tpu.memory_space<vmem>>, vector<1x32x16xf32>
    %50 = vector.shape_cast %49 : vector<1x32x16xf32> to vector<32x16xf32>
    %cst_27 = arith.constant dense<0.000000e+00> : vector<32x256xf32>
    %51 = tpu.matmul %50, %48, %cst_27 {dimension_numbers = #tpu.dot_dimension_numbers<[1], [0], [0], [1], [0, 0, 1, 1], [], []>} : vector<32x16xf32>, vector<16x256xf32>, vector<32x256xf32> -> vector<32x256xf32>
    %c0_28 = arith.constant 0 : index
    %c0_29 = arith.constant 0 : index
    %c0_30 = arith.constant 0 : index
    %52 = vector.load %arg7[%c0_28, %c0_29, %c0_30] : memref<2x32x1xf32, #tpu.memory_space<vmem>>, vector<1x32x1xf32>
    %53 = vector.shape_cast %52 : vector<1x32x1xf32> to vector<32x1xf32>
    %54 = vector.broadcast %53 : vector<32x1xf32> to vector<32x256xf32>
    %55 = arith.addf %51, %54 : vector<32x256xf32>
    %56 = arith.addf %0, %55 : vector<32x256xf32>
    %cst_31 = arith.constant 2.000000e-01 : f32
    %57 = vector.broadcast %cst_31 : f32 to vector<32x256xf32>
    %58 = arith.mulf %57, %56 : vector<32x256xf32>
    %59 = arith.maximumf %56, %58 : vector<32x256xf32>
    %c1_i32_32 = arith.constant 1 : i32
    %60 = tpu.dynamic_rotate %59 by %c1_i32_32 dim 1 : vector<32x256xf32>, i32 -> vector<32x256xf32>
    %cst_33 = arith.constant 0.000000e+00 : f32
    %61 = vector.broadcast %cst_33 : f32 to vector<32x256xf32>
    %62 = arith.select %19, %61, %60 : vector<32x256xi1>, vector<32x256xf32>
    %c255_i32_34 = arith.constant 255 : i32
    %63 = tpu.dynamic_rotate %59 by %c255_i32_34 dim 1 : vector<32x256xf32>, i32 -> vector<32x256xf32>
    %cst_35 = arith.constant 0.000000e+00 : f32
    %64 = vector.broadcast %cst_35 : f32 to vector<32x256xf32>
    %65 = arith.select %21, %64, %63 : vector<32x256xi1>, vector<32x256xf32>
    %c1 = arith.constant 1 : index
    %c0_36 = arith.constant 0 : index
    %c0_37 = arith.constant 0 : index
    %66 = vector.load %arg2[%c1, %c0_36, %c0_37] : memref<2x16x32xf32, #tpu.memory_space<vmem>>, vector<1x16x32xf32>
    %67 = vector.shape_cast %66 : vector<1x16x32xf32> to vector<16x32xf32>
    %cst_38 = arith.constant dense<0.000000e+00> : vector<16x256xf32>
    %68 = tpu.matmul %67, %62, %cst_38 {dimension_numbers = #tpu.dot_dimension_numbers<[1], [0], [0], [1], [0, 0, 1, 1], [], []>} : vector<16x32xf32>, vector<32x256xf32>, vector<16x256xf32> -> vector<16x256xf32>
    %c1_39 = arith.constant 1 : index
    %c0_40 = arith.constant 0 : index
    %c0_41 = arith.constant 0 : index
    %69 = vector.load %arg3[%c1_39, %c0_40, %c0_41] : memref<2x16x32xf32, #tpu.memory_space<vmem>>, vector<1x16x32xf32>
    %70 = vector.shape_cast %69 : vector<1x16x32xf32> to vector<16x32xf32>
    %cst_42 = arith.constant dense<0.000000e+00> : vector<16x256xf32>
    %71 = tpu.matmul %70, %59, %cst_42 {dimension_numbers = #tpu.dot_dimension_numbers<[1], [0], [0], [1], [0, 0, 1, 1], [], []>} : vector<16x32xf32>, vector<32x256xf32>, vector<16x256xf32> -> vector<16x256xf32>
    %72 = arith.addf %68, %71 : vector<16x256xf32>
    %c1_43 = arith.constant 1 : index
    %c0_44 = arith.constant 0 : index
    %c0_45 = arith.constant 0 : index
    %73 = vector.load %arg4[%c1_43, %c0_44, %c0_45] : memref<2x16x32xf32, #tpu.memory_space<vmem>>, vector<1x16x32xf32>
    %74 = vector.shape_cast %73 : vector<1x16x32xf32> to vector<16x32xf32>
    %cst_46 = arith.constant dense<0.000000e+00> : vector<16x256xf32>
    %75 = tpu.matmul %74, %65, %cst_46 {dimension_numbers = #tpu.dot_dimension_numbers<[1], [0], [0], [1], [0, 0, 1, 1], [], []>} : vector<16x32xf32>, vector<32x256xf32>, vector<16x256xf32> -> vector<16x256xf32>
    %76 = arith.addf %72, %75 : vector<16x256xf32>
    %c1_47 = arith.constant 1 : index
    %c0_48 = arith.constant 0 : index
    %c0_49 = arith.constant 0 : index
    %77 = vector.load %arg5[%c1_47, %c0_48, %c0_49] : memref<2x16x1xf32, #tpu.memory_space<vmem>>, vector<1x16x1xf32>
    %78 = vector.shape_cast %77 : vector<1x16x1xf32> to vector<16x1xf32>
    %79 = vector.broadcast %78 : vector<16x1xf32> to vector<16x256xf32>
    %80 = arith.addf %76, %79 : vector<16x256xf32>
    %cst_50 = arith.constant 2.000000e-01 : f32
    %81 = vector.broadcast %cst_50 : f32 to vector<16x256xf32>
    %82 = arith.mulf %81, %80 : vector<16x256xf32>
    %83 = arith.maximumf %80, %82 : vector<16x256xf32>
    %c1_51 = arith.constant 1 : index
    %c0_52 = arith.constant 0 : index
    %c0_53 = arith.constant 0 : index
    %84 = vector.load %arg6[%c1_51, %c0_52, %c0_53] : memref<2x32x16xf32, #tpu.memory_space<vmem>>, vector<1x32x16xf32>
    %85 = vector.shape_cast %84 : vector<1x32x16xf32> to vector<32x16xf32>
    %cst_54 = arith.constant dense<0.000000e+00> : vector<32x256xf32>
    %86 = tpu.matmul %85, %83, %cst_54 {dimension_numbers = #tpu.dot_dimension_numbers<[1], [0], [0], [1], [0, 0, 1, 1], [], []>} : vector<32x16xf32>, vector<16x256xf32>, vector<32x256xf32> -> vector<32x256xf32>
    %c1_55 = arith.constant 1 : index
    %c0_56 = arith.constant 0 : index
    %c0_57 = arith.constant 0 : index
    %87 = vector.load %arg7[%c1_55, %c0_56, %c0_57] : memref<2x32x1xf32, #tpu.memory_space<vmem>>, vector<1x32x1xf32>
    %88 = vector.shape_cast %87 : vector<1x32x1xf32> to vector<32x1xf32>
    %89 = vector.broadcast %88 : vector<32x1xf32> to vector<32x256xf32>
    %90 = arith.addf %86, %89 : vector<32x256xf32>
    %91 = arith.addf %56, %90 : vector<32x256xf32>
    %cst_58 = arith.constant 2.000000e-01 : f32
    %92 = vector.broadcast %cst_58 : f32 to vector<32x256xf32>
    %93 = arith.mulf %92, %91 : vector<32x256xf32>
    %94 = arith.maximumf %91, %93 : vector<32x256xf32>
    %c0_59 = arith.constant 0 : index
    %c0_60 = arith.constant 0 : index
    %95 = vector.load %arg8[%c0_59, %c0_60] : memref<32x256xf32, #tpu.memory_space<vmem>>, vector<32x256xf32>
    tpu.vector_store %arg8[%c0_59, %c0_60], %94 {strides = array<i32>} : memref<32x256xf32, #tpu.memory_space<vmem>>, vector<32x256xf32>,
    return
  }
  func.func @transform_0(%arg0: i32) -> (i32, i32) {
    %c0_i32 = arith.constant 0 : i32
    %c0_i32_0 = arith.constant 0 : i32
    return %c0_i32, %arg0 : i32, i32
  }
  func.func @transform_1(%arg0: i32) -> (i32, i32, i32) {
    %c0_i32 = arith.constant 0 : i32
    %c0_i32_0 = arith.constant 0 : i32
    %c0_i32_1 = arith.constant 0 : i32
    %c0_i32_2 = arith.constant 0 : i32
    return %c0_i32, %c0_i32_0, %c0_i32_1 : i32, i32, i32
  }
  func.func @transform_2(%arg0: i32) -> (i32, i32, i32) {
    %c0_i32 = arith.constant 0 : i32
    %c0_i32_0 = arith.constant 0 : i32
    %c0_i32_1 = arith.constant 0 : i32
    %c0_i32_2 = arith.constant 0 : i32
    return %c0_i32, %c0_i32_0, %c0_i32_1 : i32, i32, i32
  }
  func.func @transform_3(%arg0: i32) -> (i32, i32, i32) {
    %c0_i32 = arith.constant 0 : i32
    %c0_i32_0 = arith.constant 0 : i32
    %c0_i32_1 = arith.constant 0 : i32
    %c0_i32_2 = arith.constant 0 : i32
    return %c0_i32, %c0_i32_0, %c0_i32_1 : i32, i32, i32
  }
  func.func @transform_4(%arg0: i32) -> (i32, i32, i32) {
    %c0_i32 = arith.constant 0 : i32
    %c0_i32_0 = arith.constant 0 : i32
    %c0_i32_1 = arith.constant 0 : i32
    %c0_i32_2 = arith.constant 0 : i32
    return %c0_i32, %c0_i32_0, %c0_i32_1 : i32, i32, i32
  }
  func.func @transform_5(%arg0: i32) -> (i32, i32, i32) {
    %c0_i32 = arith.constant 0 : i32
    %c0_i32_0 = arith.constant 0 : i32
    %c0_i32_1 = arith.constant 0 : i32
    %c0_i32_2 = arith.constant 0 : i32
    return %c0_i32, %c0_i32_0, %c0_i32_1 : i32, i32, i32
  }
  func.func @transform_6(%arg0: i32) -> (i32, i32, i32) {
    %c0_i32 = arith.constant 0 : i32
    %c0_i32_0 = arith.constant 0 : i32
    %c0_i32_1 = arith.constant 0 : i32
    %c0_i32_2 = arith.constant 0 : i32
    return %c0_i32, %c0_i32_0, %c0_i32_1 : i32, i32, i32
  }
  func.func @transform_7(%arg0: i32) -> (i32, i32) {
    %c0_i32 = arith.constant 0 : i32
    %c0_i32_0 = arith.constant 0 : i32
    return %c0_i32, %arg0 : i32, i32
  }
}

</mosaic_0001>

<llo_original>
// kernel: tpu_custom_call.1
$region0: #{tpu_custom_call.1}
  #allocation0 [shape = 'u32[]', space=smem, size = 0x4, offset = 0x4, fixed_abs, tag = 'smem constant byte address 0x4 - core index']
  #allocation1 [shape = 'u32[144,128]{1,0:T(1,128)}', space=vmem, size = 0x12000, scoped, tag = 'internal scratch']
  %s0 = inlined_call_operand.vmem [shape: f32[32,512], index: 0, kind: input, shape index: {}]
  %s1 = inlined_call_operand.vmem [shape: f32[2,16,32], index: 1, kind: input, shape index: {}]
  %s2 = inlined_call_operand.hbm [shape: f32[2,16,32], index: 2, kind: input, shape index: {}]
  %s3 = inlined_call_operand.hbm [shape: f32[2,16,32], index: 3, kind: input, shape index: {}]
  %s4 = inlined_call_operand.vmem [shape: f32[2,16,1], index: 4, kind: input, shape index: {}]
  %s5 = inlined_call_operand.vmem [shape: f32[2,32,16], index: 5, kind: input, shape index: {}]
  %s6 = inlined_call_operand.vmem [shape: f32[2,32,1], index: 6, kind: input, shape index: {}]
  %s7 = inlined_call_operand.hbm [shape: f32[32,512], index: 7, kind: output, shape index: {}]
  %s8 = sld [smem:[#allocation0]]
  $region92: #{tpu_custom_call.1} parent=0
    _
  %s10 = ssub.s32 1, %s8
  %s11 = scalar_select 0, %s10, %s8
  $region1: #{tpu_custom_call.1} parent=0
    #allocation2 [shape = 'u8[65536]{0}', space=vmem, size = 0x10000, scoped, tag = 'input window, operand 0']
    #allocation3 [shape = 'u8[16384]{0}', space=vmem, size = 0x4000, scoped, tag = 'input window, operand 2, single buffered']
    #allocation4 [shape = 's32[2]{0}', space=sflag, size = 0x8, scoped, tag = 'scoped memory for tpu_custom_call.1']
    #allocation5 [shape = 's32[2]{0}', space=sflag, size = 0x8, scoped, tag = 'scoped memory for tpu_custom_call.1']
    #allocation6 [shape = 'u8[16384]{0}', space=vmem, size = 0x4000, scoped, tag = 'input window, operand 3, single buffered']
    #allocation7 [shape = 's32[1]{0}', space=sflag, size = 0x4, scoped, tag = 'scoped memory for tpu_custom_call.1']
    #allocation8 [shape = 'u8[65536]{0}', space=vmem, size = 0x10000, scoped, tag = 'output window, operand 0']
    %12 = vsyncpa [#allocation4], 0
    %13 = vsyncpa [#allocation7], 0
    %14 = vsyncpa [#allocation5], 0
    %s15 = scalar_lea.sflag [#allocation5], 1
    %16 = vsyncpa %s15, 0
    loop: start=0, step=1, limit=4
    $region2: #{tpu_custom_call.1} parent=1 // loop_pre_header
      _
    $region3: #{tpu_custom_call.1} parent=1 // loop_header
      %s18 = sphi 0, %s22
      %p19 = scmp.ge.s32.totalorder %s18, 4
      %s28 = sphi 0, %s30
      %s31 = sphi 0, %s28
      %s32 = sphi 0, %s31
      %s48 = sphi 0, %s32
      %s52 = sphi 0, %s52
      %s54 = sphi 0, %s52
      %s55 = sphi 0, %s54
      %s69 = sphi 0, %s55
      %s73 = sphi 0, %s73
      %s75 = sphi 0, %s73
      %s76 = sphi 0, %s75
      %s90 = sphi 0, %s76
      %s94 = sphi 0, %s94
      %s96 = sphi 0, %s94
      %s97 = sphi 0, %s96
      %s111 = sphi 0, %s97
      %s115 = sphi 0, %s115
      %s117 = sphi 0, %s115
      %s118 = sphi 0, %s117
      %s132 = sphi 0, %s118
      %s136 = sphi 0, %s136
      %s138 = sphi 0, %s136
      %s139 = sphi 0, %s138
      %s153 = sphi 0, %s139
      %s157 = sphi 0, %s157
      %s159 = sphi 0, %s157
      %s160 = sphi 0, %s159
      %s174 = sphi 0, %s160
      %s180 = sphi 0, %s182
      %s183 = sphi 0, %s180
      %s184 = sphi 0, %s183
      %s200 = sphi 0, %s184
    $region4: #{tpu_custom_call.1} parent=1 // loop_header_branch
      %21 = sbr.rel (%p19) target = $region8
    $region5: #{tpu_custom_call.1} parent=1 // loop_body
      %s23 = ssub.s32 %s18, 1
      %s24 = ssub.s32 %s18, 2
      %s25 = sadd.s32 %s18, 1
      %s26 = ssub.s32 %s18, %s25
      %p27 = scmp.eq.s32.totalorder %s26, 0
      %s29 = sadd.s32 %s28, 1
      %s30 = scalar_select %p27, %s28, %s29
      %p33 = pneg %p27
      %p34 = scmp.eq.s32.totalorder %s18, 1
      %p35 = por %p33, %p34
      %p36 = scmp.ne.s32.totalorder %s28, %s31
      %p37 = scmp.eq.s32.totalorder %s18, 0
      %p38 = por %p36, %p37
      %p39 = scmp.ne.s32.totalorder %s28, %s31
      %p40 = scmp.eq.s32.totalorder %s23, 1
      %p41 = por %p39, %p40
      %p42 = scmp.ne.s32.totalorder %s31, %s32
      %p43 = scmp.eq.s32.totalorder %s23, 0
      %p44 = por %p42, %p43
      %p45 = scmp.ne.s32.totalorder %s31, %s32
      %p46 = scmp.eq.s32.totalorder %s24, 1
      %p47 = por %p45, %p46
      %p49 = scmp.ne.s32.totalorder %s32, %s48
      %p50 = scmp.eq.s32.totalorder %s24, 0
      %p51 = por %p49, %p50
      %s53 = sadd.s32 %s52, 1
      %p56 = scmp.eq.s32.totalorder %s18, 1
      %p57 = scmp.ne.s32.totalorder %s52, %s54
      %p58 = scmp.eq.s32.totalorder %s18, 0
      %p59 = por %p57, %p58
      %p60 = scmp.ne.s32.totalorder %s52, %s54
      %p61 = scmp.eq.s32.totalorder %s23, 1
      %p62 = por %p60, %p61
      %p63 = scmp.ne.s32.totalorder %s54, %s55
      %p64 = scmp.eq.s32.totalorder %s23, 0
      %p65 = por %p63, %p64
      %p66 = scmp.ne.s32.totalorder %s54, %s55
      %p67 = scmp.eq.s32.totalorder %s24, 1
      %p68 = por %p66, %p67
      %p70 = scmp.ne.s32.totalorder %s55, %s69
      %p71 = scmp.eq.s32.totalorder %s24, 0
      %p72 = por %p70, %p71
      %s74 = sadd.s32 %s73, 1
      %p77 = scmp.eq.s32.totalorder %s18, 1
      %p78 = scmp.ne.s32.totalorder %s73, %s75
      %p79 = scmp.eq.s32.totalorder %s18, 0
      %p80 = por %p78, %p79
      %p81 = scmp.ne.s32.totalorder %s73, %s75
      %p82 = scmp.eq.s32.totalorder %s23, 1
      %p83 = por %p81, %p82
      %p84 = scmp.ne.s32.totalorder %s75, %s76
      %p85 = scmp.eq.s32.totalorder %s23, 0
      %p86 = por %p84, %p85
      %p87 = scmp.ne.s32.totalorder %s75, %s76
      %p88 = scmp.eq.s32.totalorder %s24, 1
      %p89 = por %p87, %p88
      %p91 = scmp.ne.s32.totalorder %s76, %s90
      %p92 = scmp.eq.s32.totalorder %s24, 0
      %p93 = por %p91, %p92
      %s95 = sadd.s32 %s94, 1
      %p98 = scmp.eq.s32.totalorder %s18, 1
      %p99 = scmp.ne.s32.totalorder %s94, %s96
      %p100 = scmp.eq.s32.totalorder %s18, 0
      %p101 = por %p99, %p100
      %p102 = scmp.ne.s32.totalorder %s94, %s96
      %p103 = scmp.eq.s32.totalorder %s23, 1
      %p104 = por %p102, %p103
      %p105 = scmp.ne.s32.totalorder %s96, %s97
      %p106 = scmp.eq.s32.totalorder %s23, 0
      %p107 = por %p105, %p106
      %p108 = scmp.ne.s32.totalorder %s96, %s97
      %p109 = scmp.eq.s32.totalorder %s24, 1
      %p110 = por %p108, %p109
      %p112 = scmp.ne.s32.totalorder %s97, %s111
      %p113 = scmp.eq.s32.totalorder %s24, 0
      %p114 = por %p112, %p113
      %s116 = sadd.s32 %s115, 1
      %p119 = scmp.eq.s32.totalorder %s18, 1
      %p120 = scmp.ne.s32.totalorder %s115, %s117
      %p121 = scmp.eq.s32.totalorder %s18, 0
      %p122 = por %p120, %p121
      %p123 = scmp.ne.s32.totalorder %s115, %s117
      %p124 = scmp.eq.s32.totalorder %s23, 1
      %p125 = por %p123, %p124
      %p126 = scmp.ne.s32.totalorder %s117, %s118
      %p127 = scmp.eq.s32.totalorder %s23, 0
      %p128 = por %p126, %p127
      %p129 = scmp.ne.s32.totalorder %s117, %s118
      %p130 = scmp.eq.s32.totalorder %s24, 1
      %p131 = por %p129, %p130
      %p133 = scmp.ne.s32.totalorder %s118, %s132
      %p134 = scmp.eq.s32.totalorder %s24, 0
      %p135 = por %p133, %p134
      %s137 = sadd.s32 %s136, 1
      %p140 = scmp.eq.s32.totalorder %s18, 1
      %p141 = scmp.ne.s32.totalorder %s136, %s138
      %p142 = scmp.eq.s32.totalorder %s18, 0
      %p143 = por %p141, %p142
      %p144 = scmp.ne.s32.totalorder %s136, %s138
      %p145 = scmp.eq.s32.totalorder %s23, 1
      %p146 = por %p144, %p145
      %p147 = scmp.ne.s32.totalorder %s138, %s139
      %p148 = scmp.eq.s32.totalorder %s23, 0
      %p149 = por %p147, %p148
      %p150 = scmp.ne.s32.totalorder %s138, %s139
      %p151 = scmp.eq.s32.totalorder %s24, 1
      %p152 = por %p150, %p151
      %p154 = scmp.ne.s32.totalorder %s139, %s153
      %p155 = scmp.eq.s32.totalorder %s24, 0
      %p156 = por %p154, %p155
      %s158 = sadd.s32 %s157, 1
      %p161 = scmp.eq.s32.totalorder %s18, 1
      %p162 = scmp.ne.s32.totalorder %s157, %s159
      %p163 = scmp.eq.s32.totalorder %s18, 0
      %p164 = por %p162, %p163
      %p165 = scmp.ne.s32.totalorder %s157, %s159
      %p166 = scmp.eq.s32.totalorder %s23, 1
      %p167 = por %p165, %p166
      %p168 = scmp.ne.s32.totalorder %s159, %s160
      %p169 = scmp.eq.s32.totalorder %s23, 0
      %p170 = por %p168, %p169
      %p171 = scmp.ne.s32.totalorder %s159, %s160
      %p172 = scmp.eq.s32.totalorder %s24, 1
      %p173 = por %p171, %p172
      %p175 = scmp.ne.s32.totalorder %s160, %s174
      %p176 = scmp.eq.s32.totalorder %s24, 0
      %p177 = por %p175, %p176
      %s178 = ssub.s32 %s18, %s25
      %p179 = scmp.eq.s32.totalorder %s178, 0
      %s181 = sadd.s32 %s180, 1
      %s182 = scalar_select %p179, %s180, %s181
      %p185 = pneg %p179
      %p186 = scmp.eq.s32.totalorder %s18, 1
      %p187 = por %p185, %p186
      %p188 = scmp.ne.s32.totalorder %s180, %s183
      %p189 = scmp.eq.s32.totalorder %s18, 0
      %p190 = por %p188, %p189
      %p191 = scmp.ne.s32.totalorder %s180, %s183
      %p192 = scmp.eq.s32.totalorder %s23, 1
      %p193 = por %p191, %p192
      %p194 = scmp.ne.s32.totalorder %s183, %s184
      %p195 = scmp.eq.s32.totalorder %s23, 0
      %p196 = por %p194, %p195
      %p197 = scmp.ne.s32.totalorder %s183, %s184
      %p198 = scmp.eq.s32.totalorder %s24, 1
      %p199 = por %p197, %p198
      %p201 = scmp.ne.s32.totalorder %s184, %s200
      %p202 = scmp.eq.s32.totalorder %s24, 0
      %p203 = por %p201, %p202
      %p204 = scmp.le.s32.totalorder 1, %s18
      %p205 = scmp.lt.s32.totalorder %s18, 3
      %p206 = pnand %p204, %p205
      %p207 = pneg %p206
      // Predicated region
      $region9: #{tpu_custom_call.1} parent=5 // pred_check
        _
      $region10: #{tpu_custom_call.1} parent=5 // pred_check_branch
        %209 = sbr.rel (%p206) target = $region12
      $region11: #{tpu_custom_call.1} parent=5 // pred_region
        %s210 = ssub.s32 %s18, 1
        // Predicated region
        $region13: #{tpu_custom_call.1} parent=11 // pred_check
          %p211 = pneg %p65
        $region14: #{tpu_custom_call.1} parent=11 // pred_check_branch
          %213 = sbr.rel (%p211) target = $region16
        $region15: #{tpu_custom_call.1} parent=11 // pred_region
          _
        $region16: #{tpu_custom_call.1} parent=11 // pred_fallthru
          _
        // Predicated region
        $region17: #{tpu_custom_call.1} parent=11 // pred_check
          %p214 = pneg %p86
        $region18: #{tpu_custom_call.1} parent=11 // pred_check_branch
          %216 = sbr.rel (%p214) target = $region20
        $region19: #{tpu_custom_call.1} parent=11 // pred_region
          %s218 = ssub.s32 512, 512
          %219 = vsyncadd [#allocation4], %s218
          %s220 = sshll.u32 [#allocation3], 4
          %s221 = int_to_ptr.vmem [resolvable:$true] %s220
          %226 = dma.hbm_to_vmem [thread:$0]  %s2, 512, %s221, [#allocation4], 128, 128, 8
        $region20: #{tpu_custom_call.1} parent=11 // pred_fallthru
          _
        // Predicated region
        $region21: #{tpu_custom_call.1} parent=11 // pred_check
          %p227 = pneg %p107
        $region22: #{tpu_custom_call.1} parent=11 // pred_check_branch
          %229 = sbr.rel (%p227) target = $region24
        $region23: #{tpu_custom_call.1} parent=11 // pred_region
          %s231 = ssub.s32 512, 512
          %232 = vsyncadd [#allocation7], %s231
          %s233 = sshll.u32 [#allocation6], 4
          %s234 = int_to_ptr.vmem [resolvable:$true] %s233
          %239 = dma.hbm_to_vmem [thread:$0]  %s3, 512, %s234, [#allocation7], 128, 128, 8
        $region24: #{tpu_custom_call.1} parent=11 // pred_fallthru
          _
        // Predicated region
        $region25: #{tpu_custom_call.1} parent=11 // pred_check
          %p240 = pneg %p128
        $region26: #{tpu_custom_call.1} parent=11 // pred_check_branch
          %242 = sbr.rel (%p240) target = $region28
        $region27: #{tpu_custom_call.1} parent=11 // pred_region
          _
        $region28: #{tpu_custom_call.1} parent=11 // pred_fallthru
          _
        // Predicated region
        $region29: #{tpu_custom_call.1} parent=11 // pred_check
          %p243 = pneg %p149
        $region30: #{tpu_custom_call.1} parent=11 // pred_check_branch
          %245 = sbr.rel (%p243) target = $region32
        $region31: #{tpu_custom_call.1} parent=11 // pred_region
          _
        $region32: #{tpu_custom_call.1} parent=11 // pred_fallthru
          _
        // Predicated region
        $region33: #{tpu_custom_call.1} parent=11 // pred_check
          %p246 = pneg %p170
        $region34: #{tpu_custom_call.1} parent=11 // pred_check_branch
          %248 = sbr.rel (%p246) target = $region36
        $region35: #{tpu_custom_call.1} parent=11 // pred_region
          _
        $region36: #{tpu_custom_call.1} parent=11 // pred_fallthru
          _
      $region12: #{tpu_custom_call.1} parent=5 // pred_fallthru
        _
      %p249 = scmp.lt.s32.totalorder %s18, 2
      // Predicated region
      $region37: #{tpu_custom_call.1} parent=5 // pred_check
        %p250 = pneg %p249
      $region38: #{tpu_custom_call.1} parent=5 // pred_check_branch
        %252 = sbr.rel (%p250) target = $region40
      $region39: #{tpu_custom_call.1} parent=5 // pred_region
        // Predicated region
        $region41: #{tpu_custom_call.1} parent=39 // pred_check
          %p253 = pneg %p38
        $region42: #{tpu_custom_call.1} parent=39 // pred_check_branch
          %255 = sbr.rel (%p253) target = $region44
        $region43: #{tpu_custom_call.1} parent=39 // pred_region
          %s256 = sand.u32 %s28, 1
          %s257 = sand.u32 %s28, 1
          %s258 = smul.addr %s257, 64
          %s259 = scalar_lea.vmem [#allocation2], %s258
          %s260 = smul.u32 2, %s18
          %s261 = smul.addr %s260, 8
          %s262 = scalar_lea.vmem %s0, %s261
          // Predicated region
          $region45: #{tpu_custom_call.1} parent=43 // pred_check
            _
          $region46: #{tpu_custom_call.1} parent=43 // pred_check_branch
            %264 = sbr.rel (0) target = $region48
          $region47: #{tpu_custom_call.1} parent=43 // pred_region
            // Predicated region
            $region49: #{tpu_custom_call.1} parent=47 // pred_check
              _
            $region50: #{tpu_custom_call.1} parent=47 // pred_check_branch
              %266 = sbr.rel (0) target = $region52
            $region51: #{tpu_custom_call.1} parent=47 // pred_region
              loop: start=0, step=1, limit=1
              $region53: #{tpu_custom_call.1} parent=51 // loop_pre_header
                _
              $region54: #{tpu_custom_call.1} parent=51 // loop_header
                %s268 = sphi 0, %s272
                %p269 = scmp.ge.s32.totalorder %s268, 1
                %s273 = sphi %s262, %s262
                %s274 = sphi %s259, %s259
              $region55: #{tpu_custom_call.1} parent=51 // loop_header_branch
                %271 = sbr.rel (%p269) target = $region59
              $region56: #{tpu_custom_call.1} parent=51 // loop_body
                %v275 = vld [vmem:[%s273] sm:$0xff]
                %276 = vst [vmem:[%s274] sm:$0xff] %v275
                %v277 = vld [vmem:[%s273 + $0x8] sm:$0xff]
                %278 = vst [vmem:[%s274 + $0x8] sm:$0xff] %v277
                %v279 = vld [vmem:[%s273 + $0x20] sm:$0xff]
                %280 = vst [vmem:[%s274 + $0x10] sm:$0xff] %v279
                %v281 = vld [vmem:[%s273 + $0x28] sm:$0xff]
                %282 = vst [vmem:[%s274 + $0x18] sm:$0xff] %v281
                %v283 = vld [vmem:[%s273 + $0x40] sm:$0xff]
                %284 = vst [vmem:[%s274 + $0x20] sm:$0xff] %v283
                %v285 = vld [vmem:[%s273 + $0x48] sm:$0xff]
                %286 = vst [vmem:[%s274 + $0x28] sm:$0xff] %v285
                %v287 = vld [vmem:[%s273 + $0x60] sm:$0xff]
                %288 = vst [vmem:[%s274 + $0x30] sm:$0xff] %v287
                %v289 = vld [vmem:[%s273 + $0x68] sm:$0xff]
                %290 = vst [vmem:[%s274 + $0x38] sm:$0xff] %v289
              $region57: #{tpu_custom_call.1} parent=51 // loop_footer
                %s272 = sadd.s32 1, %s268
              $region58: #{tpu_custom_call.1} parent=51 // loop_footer_branch
                %267 = sbr.rel target = $region54
              $region59: #{tpu_custom_call.1} parent=51 // loop_exit
                _
            $region52: #{tpu_custom_call.1} parent=47 // pred_fallthru
              _
            // Predicated region
            $region60: #{tpu_custom_call.1} parent=47 // pred_check
              _
            $region61: #{tpu_custom_call.1} parent=47 // pred_check_branch
              %292 = sbr.rel target = $region63
            $region62: #{tpu_custom_call.1} parent=47 // pred_region
              _
            $region63: #{tpu_custom_call.1} parent=47 // pred_fallthru
              _
          $region48: #{tpu_custom_call.1} parent=43 // pred_fallthru
            _
          %293 = vnop
        $region44: #{tpu_custom_call.1} parent=39 // pred_fallthru
          _
      $region40: #{tpu_custom_call.1} parent=5 // pred_fallthru
        _
      %p294 = scmp.le.s32.totalorder 1, %s18
      %p295 = scmp.lt.s32.totalorder %s18, 3
      %p296 = pnand %p294, %p295
      %p297 = pneg %p296
      // Predicated region
      $region64: #{tpu_custom_call.1} parent=5 // pred_check
        _
      $region65: #{tpu_custom_call.1} parent=5 // pred_check_branch
        %299 = sbr.rel (%p296) target = $region67
      $region66: #{tpu_custom_call.1} parent=5 // pred_region
        %s300 = ssub.s32 %s18, 1
        %s301 = sand.u32 %s31, 1
        %s302 = sand.u32 %s31, 1
        %s303 = smul.addr %s302, 64
        %s304 = scalar_lea.vmem [#allocation2], %s303
        // Predicated region
        $region68: #{tpu_custom_call.1} parent=66 // pred_check
          %p305 = pneg %p44
        $region69: #{tpu_custom_call.1} parent=66 // pred_check_branch
          %307 = sbr.rel (%p305) target = $region71
        $region70: #{tpu_custom_call.1} parent=66 // pred_region
          _
        $region71: #{tpu_custom_call.1} parent=66 // pred_fallthru
          _
        // Predicated region
        $region72: #{tpu_custom_call.1} parent=66 // pred_check
          %p308 = pneg %p86
        $region73: #{tpu_custom_call.1} parent=66 // pred_check_branch
          %310 = sbr.rel (%p308) target = $region75
        $region74: #{tpu_custom_call.1} parent=66 // pred_region
          %311 = dma.done [#allocation4], 512
        $region75: #{tpu_custom_call.1} parent=66 // pred_fallthru
          _
        // Predicated region
        $region76: #{tpu_custom_call.1} parent=66 // pred_check
          %p312 = pneg %p107
        $region77: #{tpu_custom_call.1} parent=66 // pred_check_branch
          %314 = sbr.rel (%p312) target = $region79
        $region78: #{tpu_custom_call.1} parent=66 // pred_region
          %315 = dma.done [#allocation7], 512
        $region79: #{tpu_custom_call.1} parent=66 // pred_fallthru
          _
        %s316 = sand.u32 %s31, 1
        %s317 = sand.u32 %s31, 1
        %s318 = smul.addr %s317, 64
        %s319 = scalar_lea.vmem [#allocation2], %s318
        %p320 = pneg %p44
        %p321 = pneg %p41
        %p322 = pneg %p65
        %p323 = pneg %p62
        %p324 = pneg %p86
        %p325 = pneg %p83
        %p326 = pneg %p107
        %p327 = pneg %p104
        %p328 = pneg %p128
        %p329 = pneg %p125
        %p330 = pneg %p149
        %p331 = pneg %p146
        %p332 = pneg %p170
        %p333 = pneg %p167
        %p334 = pneg %p196
        %p335 = pneg %p193
        %s336 = sand.u32 %s183, 1
        %s337 = scalar_lea.sflag [#allocation5], %s336
        %s338 = sand.u32 %s183, 1
        %s339 = smul.addr %s338, 64
        %s340 = scalar_lea.vmem [#allocation8], %s339
        %s341 = smul.u32 2, %s23
        %s342 = smul.u32 2, %s23
        %v343 = vld [vmem:[%s304] sm:$0xff]
        %v344 = vld [vmem:[%s304 + $0x8] sm:$0xff]
        %v345 = vld [vmem:[%s304 + $0x10] sm:$0xff]
        %v346 = vld [vmem:[%s304 + $0x18] sm:$0xff]
        %v347 = vld [vmem:[%s304 + $0x20] sm:$0xff]
        %v348 = vld [vmem:[%s304 + $0x28] sm:$0xff]
        %v349 = vld [vmem:[%s304 + $0x30] sm:$0xff]
        %v350 = vld [vmem:[%s304 + $0x38] sm:$0xff]
        %v351 = vlaneseq
        %v352 = vand.u32 %v351, 127
        %v353 = vadd.s32 %v352, 128
        %vm354 = vcmp.lt.s32.totalorder %v352, 0
        %v355 = vsub.s32 0, %v352
        %v356 = vsel %vm354, %v355, %v352
        %v357 = vshrl.u32 %v356, 7
        %v358 = vand.u32 %v356, 127
        %v359 = vsub.s32 0, %v358
        %v360 = vsel %vm354, %v359, %v358
        %vm361 = vcmp.lt.s32.totalorder %v353, 0
        %v362 = vsub.s32 0, %v353
        %v363 = vsel %vm361, %v362, %v353
        %v364 = vshrl.u32 %v363, 7
        %v365 = vand.u32 %v363, 127
        %v366 = vsub.s32 0, %v365
        %v367 = vsel %vm361, %v366, %v365
        %vm368 = vcmp.ne.s32.totalorder %v360, 0
        %vm369 = vcmp.ne.s32.totalorder %v367, 0
        %vm370 = vcmp.lt.s32.totalorder %v360, 0
        %vm371 = vcmp.lt.s32.totalorder %v367, 0
        %vm372 = vmand %vm370, %vm368
        %vm373 = vmand %vm371, %vm369
        %v374 = vadd.s32 %v360, 128
        %v375 = vadd.s32 %v367, 128
        %v376 = vsel %vm372, %v374, %v360
        %v377 = vsel %vm373, %v375, %v367
        %vm378 = vcmp.eq.s32.totalorder %v376, 0
        %vm379 = vcmp.eq.s32.totalorder %v377, 0
        %vm380 = vcmp.eq.s32.totalorder %v376, 127
        %vm381 = vcmp.eq.s32.totalorder %v377, 127
        %v382 = vmul.f32 %v343, 0.2
        %v383 = vmul.f32 %v344, 0.2
        %v384 = vmul.f32 %v345, 0.2
        %v385 = vmul.f32 %v346, 0.2
        %v386 = vmul.f32 %v347, 0.2
        %v387 = vmul.f32 %v348, 0.2
        %v388 = vmul.f32 %v349, 0.2
        %v389 = vmul.f32 %v350, 0.2
        %v390 = vmax.f32 %v343, %v382
        %v391 = vmax.f32 %v344, %v383
        %v392 = vmax.f32 %v345, %v384
        %v393 = vmax.f32 %v346, %v385
        %v394 = vmax.f32 %v347, %v386
        %v395 = vmax.f32 %v348, %v387
        %v396 = vmax.f32 %v349, %v388
        %v397 = vmax.f32 %v350, %v389
        %398 = vrot.lane.b32.xlu0 %v390, 1
        %v399 = vpop.permute.xlu0 %398
        %400 = vrot.lane.b32.xlu0 %v392, 1
        %v401 = vpop.permute.xlu0 %400
        %402 = vrot.lane.b32.xlu0 %v394, 1
        %v403 = vpop.permute.xlu0 %402
        %404 = vrot.lane.b32.xlu0 %v396, 1
        %v405 = vpop.permute.xlu0 %404
        %406 = vrot.lane.b32.xlu0 %v391, 1
        %v407 = vpop.permute.xlu0 %406
        %408 = vrot.lane.b32.xlu0 %v393, 1
        %v409 = vpop.permute.xlu0 %408
        %410 = vrot.lane.b32.xlu0 %v395, 1
        %v411 = vpop.permute.xlu0 %410
        %412 = vrot.lane.b32.xlu0 %v397, 1
        %v413 = vpop.permute.xlu0 %412
        %vm414 = vcmp.lt.s32.totalorder %v352, 1
        %v415 = vsel %vm414, %v399, %v407
        %v416 = vsel %vm414, %v401, %v409
        %v417 = vsel %vm414, %v403, %v411
        %v418 = vsel %vm414, %v405, %v413
        %v419 = vsel %vm414, %v407, %v399
        %v420 = vsel %vm414, %v409, %v401
        %v421 = vsel %vm414, %v411, %v403
        %v422 = vsel %vm414, %v413, %v405
        %v423 = vsel %vm378, 0.0, %v419
        %v424 = vsel %vm379, 0.0, %v415
        %v425 = vsel %vm378, 0.0, %v420
        %v426 = vsel %vm379, 0.0, %v416
        %v427 = vsel %vm378, 0.0, %v421
        %v428 = vsel %vm379, 0.0, %v417
        %v429 = vsel %vm378, 0.0, %v422
        %v430 = vsel %vm379, 0.0, %v418
        %431 = vrot.lane.b32.xlu0 %v390, 127
        %v432 = vpop.permute.xlu0 %431
        %433 = vrot.lane.b32.xlu0 %v392, 127
        %v434 = vpop.permute.xlu0 %433
        %435 = vrot.lane.b32.xlu0 %v394, 127
        %v436 = vpop.permute.xlu0 %435
        %437 = vrot.lane.b32.xlu0 %v396, 127
        %v438 = vpop.permute.xlu0 %437
        %439 = vrot.lane.b32.xlu0 %v391, 127
        %v440 = vpop.permute.xlu0 %439
        %441 = vrot.lane.b32.xlu0 %v393, 127
        %v442 = vpop.permute.xlu0 %441
        %443 = vrot.lane.b32.xlu0 %v395, 127
        %v444 = vpop.permute.xlu0 %443
        %445 = vrot.lane.b32.xlu0 %v397, 127
        %v446 = vpop.permute.xlu0 %445
        %vm447 = vcmp.lt.s32.totalorder %v352, 127
        %v448 = vsel %vm447, %v432, %v440
        %v449 = vsel %vm447, %v434, %v442
        %v450 = vsel %vm447, %v436, %v444
        %v451 = vsel %vm447, %v438, %v446
        %v452 = vsel %vm447, %v440, %v432
        %v453 = vsel %vm447, %v442, %v434
        %v454 = vsel %vm447, %v444, %v436
        %v455 = vsel %vm447, %v446, %v438
        %v456 = vsel %vm380, 0.0, %v448
        %v457 = vsel %vm381, 0.0, %v452
        %v458 = vsel %vm380, 0.0, %v449
        %v459 = vsel %vm381, 0.0, %v453
        %v460 = vsel %vm380, 0.0, %v450
        %v461 = vsel %vm381, 0.0, %v454
        %v462 = vsel %vm380, 0.0, %v451
        %v463 = vsel %vm381, 0.0, %v455
        %v464 = vld [vmem:[%s1] sm:$0xff]
        %v465 = vld [vmem:[%s1 + $0x8] sm:$0xff]
        %v466 = vld [vmem:[#allocation3] sm:$0xff]
        %v467 = vld [vmem:[#allocation3 + $0x8] sm:$0xff]
        %vm468 = vcmask 261120
        %v470 = vsel %vm468, %v466, 0
        %v473 = vsel %vm468, %v467, 0
        %475 = vmatprep.subr.mxu0 %v391
        %476 = vmatpush1.msra.mxu0 %v390
        %477 = vmatprep.subr.mxu0 %v393
        %478 = vmatpush1.msra.mxu0 %v392
        %479 = vmatprep.subr.mxu0 %v395
        %480 = vmatpush1.msra.mxu0 %v394
        %481 = vmatprep.subr.mxu0 %v397
        %482 = vmatpush1.msra.mxu0 %v396
        %483 = vmatprep.subr.mxu0 0.0
        %484 = vmatpush1.msra.mxu0 0.0
        %485 = vmatprep.subr.mxu0 0.0
        %486 = vmatpush1.msra.mxu0 0.0
        %487 = vmatprep.subr.mxu0 0.0
        %488 = vmatpush1.msra.mxu0 0.0
        %489 = vmatprep.subr.mxu0 0.0
        %490 = vmatpush1.msra.mxu0 0.0
        %491 = vmatprep.subr.mxu0 0.0
        %492 = vmatpush1.msra.mxu0 0.0
        %493 = vmatprep.subr.mxu0 0.0
        %494 = vmatpush1.msra.mxu0 0.0
        %495 = vmatprep.subr.mxu0 0.0
        %496 = vmatpush1.msra.mxu0 0.0
        %497 = vmatprep.subr.mxu0 0.0
        %498 = vmatpush1.msra.mxu0 0.0
        %499 = vmatprep.subr.mxu0 0.0
        %500 = vmatpush1.msra.mxu0 0.0
        %501 = vmatprep.subr.mxu0 0.0
        %502 = vmatpush1.msra.mxu0 0.0
        %503 = vmatprep.subr.mxu0 0.0
        %504 = vmatpush1.msra.mxu0 0.0
        %505 = vmatprep.subr.mxu0 0.0
        %506 = vmatpush1.msra.mxu0 0.0
        %507 = vmatprep.subr.mxu0 0.0
        %508 = vmatpush1.msra.mxu0 0.0
        %509 = vmatprep.subr.mxu0 0.0
        %510 = vmatpush1.msra.mxu0 0.0
        %511 = vmatprep.subr.mxu0 0.0
        %512 = vmatpush1.msra.mxu0 0.0
        %513 = vmatprep.subr.mxu0 0.0
        %514 = vmatpush1.msra.mxu0 0.0
        %515 = vmatprep.subr.mxu0 0.0
        %516 = vmatpush1.msra.mxu0 0.0
        %517 = vmatprep.subr.mxu0 0.0
        %518 = vmatpush1.msra.mxu0 0.0
        %519 = vmatprep.subr.mxu0 0.0
        %520 = vmatpush1.msra.mxu0 0.0
        %521 = vmatprep.subr.mxu0 0.0
        %522 = vmatpush1.msra.mxu0 0.0
        %523 = vmatprep.subr.mxu0 0.0
        %524 = vmatpush1.msra.mxu0 0.0
        %525 = vmatprep.subr.mxu0 0.0
        %526 = vmatpush1.msra.mxu0 0.0
        %527 = vmatprep.subr.mxu0 0.0
        %528 = vmatpush1.msra.mxu0 0.0
        %529 = vmatprep.subr.mxu0 0.0
        %530 = vmatpush1.msra.mxu0 0.0
        %531 = vmatprep.subr.mxu0 0.0
        %532 = vmatpush1.msra.mxu0 0.0
        %533 = vmatprep.subr.mxu0 0.0
        %534 = vmatpush1.msra.mxu0 0.0
        %535 = vmatprep.subr.mxu0 0.0
        %536 = vmatpush1.msra.mxu0 0.0
        %537 = vmatprep.subr.mxu0 0.0
        %538 = vmatpush1.msra.mxu0 0.0
        %539 = vmatprep.mubr.f32.mxu0 0.0
        %540 = vmatmul.mubr.f32.gmra.mrb[0].mxu0 %v470
        %v541 = vpop.f32.mrb[0].mxu0
        %v542 = vadd.f32 0.0, %v541
        %v543 = vpop.f32.mrb[0].mxu0
        %v544 = vadd.f32 0.0, %v543
        %545 = vmatprep.mubr.f32.mxu0 0.0
        %546 = vmatmul.mubr.f32.gmra.mrb[0].mxu0 %v473
        %v547 = vpop.f32.mrb[0].mxu0
        %v548 = vadd.f32 0.0, %v547
        %v549 = vpop.f32.mrb[0].mxu0
        %v550 = vadd.f32 0.0, %v549
        %551 = vdwg.mxu0
        %v553 = vsel %vm468, %v464, 0
        %v556 = vsel %vm468, %v465, 0
        %558 = vmatprep.subr.mxu0 %v424
        %559 = vmatpush1.msra.mxu0 %v423
        %560 = vmatprep.subr.mxu0 %v426
        %561 = vmatpush1.msra.mxu0 %v425
        %562 = vmatprep.subr.mxu0 %v428
        %563 = vmatpush1.msra.mxu0 %v427
        %564 = vmatprep.subr.mxu0 %v430
        %565 = vmatpush1.msra.mxu0 %v429
        %566 = vmatprep.subr.mxu0 0.0
        %567 = vmatpush1.msra.mxu0 0.0
        %568 = vmatprep.subr.mxu0 0.0
        %569 = vmatpush1.msra.mxu0 0.0
        %570 = vmatprep.subr.mxu0 0.0
        %571 = vmatpush1.msra.mxu0 0.0
        %572 = vmatprep.subr.mxu0 0.0
        %573 = vmatpush1.msra.mxu0 0.0
        %574 = vmatprep.subr.mxu0 0.0
        %575 = vmatpush1.msra.mxu0 0.0
        %576 = vmatprep.subr.mxu0 0.0
        %577 = vmatpush1.msra.mxu0 0.0
        %578 = vmatprep.subr.mxu0 0.0
        %579 = vmatpush1.msra.mxu0 0.0
        %580 = vmatprep.subr.mxu0 0.0
        %581 = vmatpush1.msra.mxu0 0.0
        %582 = vmatprep.subr.mxu0 0.0
        %583 = vmatpush1.msra.mxu0 0.0
        %584 = vmatprep.subr.mxu0 0.0
        %585 = vmatpush1.msra.mxu0 0.0
        %586 = vmatprep.subr.mxu0 0.0
        %587 = vmatpush1.msra.mxu0 0.0
        %588 = vmatprep.subr.mxu0 0.0
        %589 = vmatpush1.msra.mxu0 0.0
        %590 = vmatprep.subr.mxu0 0.0
        %591 = vmatpush1.msra.mxu0 0.0
        %592 = vmatprep.subr.mxu0 0.0
        %593 = vmatpush1.msra.mxu0 0.0
        %594 = vmatprep.subr.mxu0 0.0
        %595 = vmatpush1.msra.mxu0 0.0
        %596 = vmatprep.subr.mxu0 0.0
        %597 = vmatpush1.msra.mxu0 0.0
        %598 = vmatprep.subr.mxu0 0.0
        %599 = vmatpush1.msra.mxu0 0.0
        %600 = vmatprep.subr.mxu0 0.0
        %601 = vmatpush1.msra.mxu0 0.0
        %602 = vmatprep.subr.mxu0 0.0
        %603 = vmatpush1.msra.mxu0 0.0
        %604 = vmatprep.subr.mxu0 0.0
        %605 = vmatpush1.msra.mxu0 0.0
        %606 = vmatprep.subr.mxu0 0.0
        %607 = vmatpush1.msra.mxu0 0.0
        %608 = vmatprep.subr.mxu0 0.0
        %609 = vmatpush1.msra.mxu0 0.0
        %610 = vmatprep.subr.mxu0 0.0
        %611 = vmatpush1.msra.mxu0 0.0
        %612 = vmatprep.subr.mxu0 0.0
        %613 = vmatpush1.msra.mxu0 0.0
        %614 = vmatprep.subr.mxu0 0.0
        %615 = vmatpush1.msra.mxu0 0.0
        %616 = vmatprep.subr.mxu0 0.0
        %617 = vmatpush1.msra.mxu0 0.0
        %618 = vmatprep.subr.mxu0 0.0
        %619 = vmatpush1.msra.mxu0 0.0
        %620 = vmatprep.subr.mxu0 0.0
        %621 = vmatpush1.msra.mxu0 0.0
        %622 = vmatprep.mubr.f32.mxu0 0.0
        %623 = vmatmul.mubr.f32.gmra.mrb[0].mxu0 %v553
        %v624 = vpop.f32.mrb[0].mxu0
        %v625 = vadd.f32 %v542, %v624
        %v626 = vpop.f32.mrb[0].mxu0
        %v627 = vadd.f32 %v544, %v626
        %628 = vmatprep.mubr.f32.mxu0 0.0
        %629 = vmatmul.mubr.f32.gmra.mrb[0].mxu0 %v556
        %v630 = vpop.f32.mrb[0].mxu0
        %v631 = vadd.f32 %v548, %v630
        %v632 = vpop.f32.mrb[0].mxu0
        %v633 = vadd.f32 %v550, %v632
        %634 = vdwg.mxu0
        %v635 = vld [vmem:[#allocation6] sm:$0xff]
        %v636 = vld [vmem:[#allocation6 + $0x8] sm:$0xff]
        %v638 = vsel %vm468, %v635, 0
        %v641 = vsel %vm468, %v636, 0
        %643 = vmatprep.subr.mxu0 %v457
        %644 = vmatpush1.msra.mxu0 %v456
        %645 = vmatprep.subr.mxu0 %v459
        %646 = vmatpush1.msra.mxu0 %v458
        %647 = vmatprep.subr.mxu0 %v461
        %648 = vmatpush1.msra.mxu0 %v460
        %649 = vmatprep.subr.mxu0 %v463
        %650 = vmatpush1.msra.mxu0 %v462
        %651 = vmatprep.subr.mxu0 0.0
        %652 = vmatpush1.msra.mxu0 0.0
        %653 = vmatprep.subr.mxu0 0.0
        %654 = vmatpush1.msra.mxu0 0.0
        %655 = vmatprep.subr.mxu0 0.0
        %656 = vmatpush1.msra.mxu0 0.0
        %657 = vmatprep.subr.mxu0 0.0
        %658 = vmatpush1.msra.mxu0 0.0
        %659 = vmatprep.subr.mxu0 0.0
        %660 = vmatpush1.msra.mxu0 0.0
        %661 = vmatprep.subr.mxu0 0.0
        %662 = vmatpush1.msra.mxu0 0.0
        %663 = vmatprep.subr.mxu0 0.0
        %664 = vmatpush1.msra.mxu0 0.0
        %665 = vmatprep.subr.mxu0 0.0
        %666 = vmatpush1.msra.mxu0 0.0
        %667 = vmatprep.subr.mxu0 0.0
        %668 = vmatpush1.msra.mxu0 0.0
        %669 = vmatprep.subr.mxu0 0.0
        %670 = vmatpush1.msra.mxu0 0.0
        %671 = vmatprep.subr.mxu0 0.0
        %672 = vmatpush1.msra.mxu0 0.0
        %673 = vmatprep.subr.mxu0 0.0
        %674 = vmatpush1.msra.mxu0 0.0
        %675 = vmatprep.subr.mxu0 0.0
        %676 = vmatpush1.msra.mxu0 0.0
        %677 = vmatprep.subr.mxu0 0.0
        %678 = vmatpush1.msra.mxu0 0.0
        %679 = vmatprep.subr.mxu0 0.0
        %680 = vmatpush1.msra.mxu0 0.0
        %681 = vmatprep.subr.mxu0 0.0
        %682 = vmatpush1.msra.mxu0 0.0
        %683 = vmatprep.subr.mxu0 0.0
        %684 = vmatpush1.msra.mxu0 0.0
        %685 = vmatprep.subr.mxu0 0.0
        %686 = vmatpush1.msra.mxu0 0.0
        %687 = vmatprep.subr.mxu0 0.0
        %688 = vmatpush1.msra.mxu0 0.0
        %689 = vmatprep.subr.mxu0 0.0
        %690 = vmatpush1.msra.mxu0 0.0
        %691 = vmatprep.subr.mxu0 0.0
        %692 = vmatpush1.msra.mxu0 0.0
        %693 = vmatprep.subr.mxu0 0.0
        %694 = vmatpush1.msra.mxu0 0.0
        %695 = vmatprep.subr.mxu0 0.0
        %696 = vmatpush1.msra.mxu0 0.0
        %697 = vmatprep.subr.mxu0 0.0
        %698 = vmatpush1.msra.mxu0 0.0
        %699 = vmatprep.subr.mxu0 0.0
        %700 = vmatpush1.msra.mxu0 0.0
        %701 = vmatprep.subr.mxu0 0.0
        %702 = vmatpush1.msra.mxu0 0.0
        %703 = vmatprep.subr.mxu0 0.0
        %704 = vmatpush1.msra.mxu0 0.0
        %705 = vmatprep.subr.mxu0 0.0
        %706 = vmatpush1.msra.mxu0 0.0
        %707 = vmatprep.mubr.f32.mxu0 0.0
        %708 = vmatmul.mubr.f32.gmra.mrb[0].mxu0 %v638
        %v709 = vpop.f32.mrb[0].mxu0
        %v710 = vadd.f32 0.0, %v709
        %v711 = vpop.f32.mrb[0].mxu0
        %v712 = vadd.f32 0.0, %v711
        %713 = vmatprep.mubr.f32.mxu0 0.0
        %714 = vmatmul.mubr.f32.gmra.mrb[0].mxu0 %v641
        %v715 = vpop.f32.mrb[0].mxu0
        %v716 = vadd.f32 0.0, %v715
        %v717 = vpop.f32.mrb[0].mxu0
        %v718 = vadd.f32 0.0, %v717
        %719 = vdwg.mxu0
        %v720 = vadd.f32 %v625, %v710
        %v721 = vadd.f32 %v627, %v712
        %v722 = vadd.f32 %v631, %v716
        %v723 = vadd.f32 %v633, %v718
        %v724 = vld [vmem:[%s4] sm:$0xff]
        %v725 = vld [vmem:[%s4 + $0x8] sm:$0xff]
        %727 = vset.pattern.permute.xlu0 0
        %728 = vperm.xlu0 %727, %v724
        %v729 = vpop.permute.xlu0 %728
        %732 = vset.pattern.permute.xlu0 0
        %733 = vperm.xlu0 %732, %v725
        %v734 = vpop.permute.xlu0 %733
        %v736 = vadd.f32 %v720, %v729
        %v737 = vadd.f32 %v721, %v729
        %v738 = vadd.f32 %v722, %v734
        %v739 = vadd.f32 %v723, %v734
        %v740 = vmul.f32 %v736, 0.2
        %v741 = vmul.f32 %v737, 0.2
        %v742 = vmul.f32 %v738, 0.2
        %v743 = vmul.f32 %v739, 0.2
        %v744 = vmax.f32 %v736, %v740
        %v745 = vmax.f32 %v737, %v741
        %v746 = vmax.f32 %v738, %v742
        %v747 = vmax.f32 %v739, %v743
        %v748 = vld [vmem:[%s5] sm:$0xff]
        %v749 = vld [vmem:[%s5 + $0x8] sm:$0xff]
        %v750 = vld [vmem:[%s5 + $0x10] sm:$0xff]
        %v751 = vld [vmem:[%s5 + $0x18] sm:$0xff]
        %v752 = vld [vmem:[%s6] sm:$0xff]
        %v753 = vld [vmem:[%s6 + $0x8] sm:$0xff]
        %v754 = vld [vmem:[%s6 + $0x10] sm:$0xff]
        %v755 = vld [vmem:[%s6 + $0x18] sm:$0xff]
        %757 = vset.pattern.permute.xlu0 0
        %758 = vperm.xlu0 %757, %v752
        %v759 = vpop.permute.xlu0 %758
        %762 = vset.pattern.permute.xlu0 0
        %763 = vperm.xlu0 %762, %v753
        %v764 = vpop.permute.xlu0 %763
        %767 = vset.pattern.permute.xlu0 0
        %768 = vperm.xlu0 %767, %v754
        %v769 = vpop.permute.xlu0 %768
        %772 = vset.pattern.permute.xlu0 0
        %773 = vperm.xlu0 %772, %v755
        %v774 = vpop.permute.xlu0 %773
        %vm776 = vcmask 130048
        %v778 = vsel %vm776, %v748, 0
        %v781 = vsel %vm776, %v749, 0
        %v784 = vsel %vm776, %v750, 0
        %v787 = vsel %vm776, %v751, 0
        %789 = vmatprep.subr.mxu0 %v745
        %790 = vmatpush1.msra.mxu0 %v744
        %791 = vmatprep.subr.mxu0 %v747
        %792 = vmatpush1.msra.mxu0 %v746
        %793 = vmatprep.subr.mxu0 0.0
        %794 = vmatpush1.msra.mxu0 0.0
        %795 = vmatprep.subr.mxu0 0.0
        %796 = vmatpush1.msra.mxu0 0.0
        %797 = vmatprep.subr.mxu0 0.0
        %798 = vmatpush1.msra.mxu0 0.0
        %799 = vmatprep.subr.mxu0 0.0
        %800 = vmatpush1.msra.mxu0 0.0
        %801 = vmatprep.subr.mxu0 0.0
        %802 = vmatpush1.msra.mxu0 0.0
        %803 = vmatprep.subr.mxu0 0.0
        %804 = vmatpush1.msra.mxu0 0.0
        %805 = vmatprep.subr.mxu0 0.0
        %806 = vmatpush1.msra.mxu0 0.0
        %807 = vmatprep.subr.mxu0 0.0
        %808 = vmatpush1.msra.mxu0 0.0
        %809 = vmatprep.subr.mxu0 0.0
        %810 = vmatpush1.msra.mxu0 0.0
        %811 = vmatprep.subr.mxu0 0.0
        %812 = vmatpush1.msra.mxu0 0.0
        %813 = vmatprep.subr.mxu0 0.0
        %814 = vmatpush1.msra.mxu0 0.0
        %815 = vmatprep.subr.mxu0 0.0
        %816 = vmatpush1.msra.mxu0 0.0
        %817 = vmatprep.subr.mxu0 0.0
        %818 = vmatpush1.msra.mxu0 0.0
        %819 = vmatprep.subr.mxu0 0.0
        %820 = vmatpush1.msra.mxu0 0.0
        %821 = vmatprep.subr.mxu0 0.0
        %822 = vmatpush1.msra.mxu0 0.0
        %823 = vmatprep.subr.mxu0 0.0
        %824 = vmatpush1.msra.mxu0 0.0
        %825 = vmatprep.subr.mxu0 0.0
        %826 = vmatpush1.msra.mxu0 0.0
        %827 = vmatprep.subr.mxu0 0.0
        %828 = vmatpush1.msra.mxu0 0.0
        %829 = vmatprep.subr.mxu0 0.0
        %830 = vmatpush1.msra.mxu0 0.0
        %831 = vmatprep.subr.mxu0 0.0
        %832 = vmatpush1.msra.mxu0 0.0
        %833 = vmatprep.subr.mxu0 0.0
        %834 = vmatpush1.msra.mxu0 0.0
        %835 = vmatprep.subr.mxu0 0.0
        %836 = vmatpush1.msra.mxu0 0.0
        %837 = vmatprep.subr.mxu0 0.0
        %838 = vmatpush1.msra.mxu0 0.0
        %839 = vmatprep.subr.mxu0 0.0
        %840 = vmatpush1.msra.mxu0 0.0
        %841 = vmatprep.subr.mxu0 0.0
        %842 = vmatpush1.msra.mxu0 0.0
        %843 = vmatprep.subr.mxu0 0.0
        %844 = vmatpush1.msra.mxu0 0.0
        %845 = vmatprep.subr.mxu0 0.0
        %846 = vmatpush1.msra.mxu0 0.0
        %847 = vmatprep.subr.mxu0 0.0
        %848 = vmatpush1.msra.mxu0 0.0
        %849 = vmatprep.subr.mxu0 0.0
        %850 = vmatpush1.msra.mxu0 0.0
        %851 = vmatprep.subr.mxu0 0.0
        %852 = vmatpush1.msra.mxu0 0.0
        %853 = vmatprep.mubr.f32.mxu0 0.0
        %854 = vmatmul.mubr.f32.gmra.mrb[0].mxu0 %v778
        %v855 = vpop.f32.mrb[0].mxu0
        %v856 = vadd.f32 %v759, %v855
        %v857 = vpop.f32.mrb[0].mxu0
        %v858 = vadd.f32 %v759, %v857
        %859 = vmatprep.mubr.f32.mxu0 0.0
        %860 = vmatmul.mubr.f32.gmra.mrb[0].mxu0 %v781
        %v861 = vpop.f32.mrb[0].mxu0
        %v862 = vadd.f32 %v764, %v861
        %v863 = vpop.f32.mrb[0].mxu0
        %v864 = vadd.f32 %v764, %v863
        %865 = vmatprep.mubr.f32.mxu0 0.0
        %866 = vmatmul.mubr.f32.gmra.mrb[0].mxu0 %v784
        %v867 = vpop.f32.mrb[0].mxu0
        %v868 = vadd.f32 %v769, %v867
        %v869 = vpop.f32.mrb[0].mxu0
        %v870 = vadd.f32 %v769, %v869
        %871 = vmatprep.mubr.f32.mxu0 0.0
        %872 = vmatmul.mubr.f32.gmra.mrb[0].mxu0 %v787
        %v873 = vpop.f32.mrb[0].mxu0
        %v874 = vadd.f32 %v774, %v873
        %v875 = vpop.f32.mrb[0].mxu0
        %v876 = vadd.f32 %v774, %v875
        %877 = vdwg.mxu0
        %v878 = vadd.f32 %v343, %v856
        %v879 = vadd.f32 %v344, %v858
        %v880 = vadd.f32 %v345, %v862
        %v881 = vadd.f32 %v346, %v864
        %v882 = vadd.f32 %v347, %v868
        %v883 = vadd.f32 %v348, %v870
        %v884 = vadd.f32 %v349, %v874
        %v885 = vadd.f32 %v350, %v876
        %v886 = vmul.f32 %v878, 0.2
        %v887 = vmul.f32 %v879, 0.2
        %v888 = vmul.f32 %v880, 0.2
        %v889 = vmul.f32 %v881, 0.2
        %v890 = vmul.f32 %v882, 0.2
        %v891 = vmul.f32 %v883, 0.2
        %v892 = vmul.f32 %v884, 0.2
        %v893 = vmul.f32 %v885, 0.2
        %v894 = vmax.f32 %v878, %v886
        %v895 = vmax.f32 %v879, %v887
        %v896 = vmax.f32 %v880, %v888
        %v897 = vmax.f32 %v881, %v889
        %v898 = vmax.f32 %v882, %v890
        %v899 = vmax.f32 %v883, %v891
        %v900 = vmax.f32 %v884, %v892
        %v901 = vmax.f32 %v885, %v893
        %902 = vrot.lane.b32.xlu0 %v894, 1
        %v903 = vpop.permute.xlu0 %902
        %904 = vrot.lane.b32.xlu0 %v896, 1
        %v905 = vpop.permute.xlu0 %904
        %906 = vrot.lane.b32.xlu0 %v898, 1
        %v907 = vpop.permute.xlu0 %906
        %908 = vrot.lane.b32.xlu0 %v900, 1
        %v909 = vpop.permute.xlu0 %908
        %910 = vrot.lane.b32.xlu0 %v895, 1
        %v911 = vpop.permute.xlu0 %910
        %912 = vrot.lane.b32.xlu0 %v897, 1
        %v913 = vpop.permute.xlu0 %912
        %914 = vrot.lane.b32.xlu0 %v899, 1
        %v915 = vpop.permute.xlu0 %914
        %916 = vrot.lane.b32.xlu0 %v901, 1
        %v917 = vpop.permute.xlu0 %916
        %v918 = vsel %vm414, %v903, %v911
        %v919 = vsel %vm414, %v905, %v913
        %v920 = vsel %vm414, %v907, %v915
        %v921 = vsel %vm414, %v909, %v917
        %v922 = vsel %vm414, %v911, %v903
        %v923 = vsel %vm414, %v913, %v905
        %v924 = vsel %vm414, %v915, %v907
        %v925 = vsel %vm414, %v917, %v909
        %v926 = vsel %vm378, 0.0, %v922
        %v927 = vsel %vm379, 0.0, %v918
        %v928 = vsel %vm378, 0.0, %v923
        %v929 = vsel %vm379, 0.0, %v919
        %v930 = vsel %vm378, 0.0, %v924
        %v931 = vsel %vm379, 0.0, %v920
        %v932 = vsel %vm378, 0.0, %v925
        %v933 = vsel %vm379, 0.0, %v921
        %934 = vrot.lane.b32.xlu0 %v894, 127
        %v935 = vpop.permute.xlu0 %934
        %936 = vrot.lane.b32.xlu0 %v896, 127
        %v937 = vpop.permute.xlu0 %936
        %938 = vrot.lane.b32.xlu0 %v898, 127
        %v939 = vpop.permute.xlu0 %938
        %940 = vrot.lane.b32.xlu0 %v900, 127
        %v941 = vpop.permute.xlu0 %940
        %942 = vrot.lane.b32.xlu0 %v895, 127
        %v943 = vpop.permute.xlu0 %942
        %944 = vrot.lane.b32.xlu0 %v897, 127
        %v945 = vpop.permute.xlu0 %944
        %946 = vrot.lane.b32.xlu0 %v899, 127
        %v947 = vpop.permute.xlu0 %946
        %948 = vrot.lane.b32.xlu0 %v901, 127
        %v949 = vpop.permute.xlu0 %948
        %v950 = vsel %vm447, %v935, %v943
        %v951 = vsel %vm447, %v937, %v945
        %v952 = vsel %vm447, %v939, %v947
        %v953 = vsel %vm447, %v941, %v949
        %v954 = vsel %vm447, %v943, %v935
        %v955 = vsel %vm447, %v945, %v937
        %v956 = vsel %vm447, %v947, %v939
        %v957 = vsel %vm447, %v949, %v941
        %v958 = vsel %vm380, 0.0, %v950
        %v959 = vsel %vm381, 0.0, %v954
        %v960 = vsel %vm380, 0.0, %v951
        %v961 = vsel %vm381, 0.0, %v955
        %v962 = vsel %vm380, 0.0, %v952
        %v963 = vsel %vm381, 0.0, %v956
        %v964 = vsel %vm380, 0.0, %v953
        %v965 = vsel %vm381, 0.0, %v957
        %s966 = scalar_lea.vmem %s1, 16
        %v967 = vld [vmem:[%s966] sm:$0xff]
        %v968 = vld [vmem:[%s966 + $0x8] sm:$0xff]
        %s969 = scalar_lea.vmem [#allocation3], 16
        %v970 = vld [vmem:[%s969] sm:$0xff]
        %v971 = vld [vmem:[%s969 + $0x8] sm:$0xff]
        %v973 = vsel %vm468, %v970, 0
        %v976 = vsel %vm468, %v971, 0
        %978 = vmatprep.subr.mxu0 %v895
        %979 = vmatpush1.msra.mxu0 %v894
        %980 = vmatprep.subr.mxu0 %v897
        %981 = vmatpush1.msra.mxu0 %v896
        %982 = vmatprep.subr.mxu0 %v899
        %983 = vmatpush1.msra.mxu0 %v898
        %984 = vmatprep.subr.mxu0 %v901
        %985 = vmatpush1.msra.mxu0 %v900
        %986 = vmatprep.subr.mxu0 0.0
        %987 = vmatpush1.msra.mxu0 0.0
        %988 = vmatprep.subr.mxu0 0.0
        %989 = vmatpush1.msra.mxu0 0.0
        %990 = vmatprep.subr.mxu0 0.0
        %991 = vmatpush1.msra.mxu0 0.0
        %992 = vmatprep.subr.mxu0 0.0
        %993 = vmatpush1.msra.mxu0 0.0
        %994 = vmatprep.subr.mxu0 0.0
        %995 = vmatpush1.msra.mxu0 0.0
        %996 = vmatprep.subr.mxu0 0.0
        %997 = vmatpush1.msra.mxu0 0.0
        %998 = vmatprep.subr.mxu0 0.0
        %999 = vmatpush1.msra.mxu0 0.0
        %1000 = vmatprep.subr.mxu0 0.0
        %1001 = vmatpush1.msra.mxu0 0.0
        %1002 = vmatprep.subr.mxu0 0.0
        %1003 = vmatpush1.msra.mxu0 0.0
        %1004 = vmatprep.subr.mxu0 0.0
        %1005 = vmatpush1.msra.mxu0 0.0
        %1006 = vmatprep.subr.mxu0 0.0
        %1007 = vmatpush1.msra.mxu0 0.0
        %1008 = vmatprep.subr.mxu0 0.0
        %1009 = vmatpush1.msra.mxu0 0.0
        %1010 = vmatprep.subr.mxu0 0.0
        %1011 = vmatpush1.msra.mxu0 0.0
        %1012 = vmatprep.subr.mxu0 0.0
        %1013 = vmatpush1.msra.mxu0 0.0
        %1014 = vmatprep.subr.mxu0 0.0
        %1015 = vmatpush1.msra.mxu0 0.0
        %1016 = vmatprep.subr.mxu0 0.0
        %1017 = vmatpush1.msra.mxu0 0.0
        %1018 = vmatprep.subr.mxu0 0.0
        %1019 = vmatpush1.msra.mxu0 0.0
        %1020 = vmatprep.subr.mxu0 0.0
        %1021 = vmatpush1.msra.mxu0 0.0
        %1022 = vmatprep.subr.mxu0 0.0
        %1023 = vmatpush1.msra.mxu0 0.0
        %1024 = vmatprep.subr.mxu0 0.0
        %1025 = vmatpush1.msra.mxu0 0.0
        %1026 = vmatprep.subr.mxu0 0.0
        %1027 = vmatpush1.msra.mxu0 0.0
        %1028 = vmatprep.subr.mxu0 0.0
        %1029 = vmatpush1.msra.mxu0 0.0
        %1030 = vmatprep.subr.mxu0 0.0
        %1031 = vmatpush1.msra.mxu0 0.0
        %1032 = vmatprep.subr.mxu0 0.0
        %1033 = vmatpush1.msra.mxu0 0.0
        %1034 = vmatprep.subr.mxu0 0.0
        %1035 = vmatpush1.msra.mxu0 0.0
        %1036 = vmatprep.subr.mxu0 0.0
        %1037 = vmatpush1.msra.mxu0 0.0
        %1038 = vmatprep.subr.mxu0 0.0
        %1039 = vmatpush1.msra.mxu0 0.0
        %1040 = vmatprep.subr.mxu0 0.0
        %1041 = vmatpush1.msra.mxu0 0.0
        %1042 = vmatprep.mubr.f32.mxu0 0.0
        %1043 = vmatmul.mubr.f32.gmra.mrb[0].mxu0 %v973
        %v1044 = vpop.f32.mrb[0].mxu0
        %v1045 = vadd.f32 0.0, %v1044
        %v1046 = vpop.f32.mrb[0].mxu0
        %v1047 = vadd.f32 0.0, %v1046
        %1048 = vmatprep.mubr.f32.mxu0 0.0
        %1049 = vmatmul.mubr.f32.gmra.mrb[0].mxu0 %v976
        %v1050 = vpop.f32.mrb[0].mxu0
        %v1051 = vadd.f32 0.0, %v1050
        %v1052 = vpop.f32.mrb[0].mxu0
        %v1053 = vadd.f32 0.0, %v1052
        %1054 = vdwg.mxu0
        %v1056 = vsel %vm468, %v967, 0
        %v1059 = vsel %vm468, %v968, 0
        %1061 = vmatprep.subr.mxu0 %v927
        %1062 = vmatpush1.msra.mxu0 %v926
        %1063 = vmatprep.subr.mxu0 %v929
        %1064 = vmatpush1.msra.mxu0 %v928
        %1065 = vmatprep.subr.mxu0 %v931
        %1066 = vmatpush1.msra.mxu0 %v930
        %1067 = vmatprep.subr.mxu0 %v933
        %1068 = vmatpush1.msra.mxu0 %v932
        %1069 = vmatprep.subr.mxu0 0.0
        %1070 = vmatpush1.msra.mxu0 0.0
        %1071 = vmatprep.subr.mxu0 0.0
        %1072 = vmatpush1.msra.mxu0 0.0
        %1073 = vmatprep.subr.mxu0 0.0
        %1074 = vmatpush1.msra.mxu0 0.0
        %1075 = vmatprep.subr.mxu0 0.0
        %1076 = vmatpush1.msra.mxu0 0.0
        %1077 = vmatprep.subr.mxu0 0.0
        %1078 = vmatpush1.msra.mxu0 0.0
        %1079 = vmatprep.subr.mxu0 0.0
        %1080 = vmatpush1.msra.mxu0 0.0
        %1081 = vmatprep.subr.mxu0 0.0
        %1082 = vmatpush1.msra.mxu0 0.0
        %1083 = vmatprep.subr.mxu0 0.0
        %1084 = vmatpush1.msra.mxu0 0.0
        %1085 = vmatprep.subr.mxu0 0.0
        %1086 = vmatpush1.msra.mxu0 0.0
        %1087 = vmatprep.subr.mxu0 0.0
        %1088 = vmatpush1.msra.mxu0 0.0
        %1089 = vmatprep.subr.mxu0 0.0
        %1090 = vmatpush1.msra.mxu0 0.0
        %1091 = vmatprep.subr.mxu0 0.0
        %1092 = vmatpush1.msra.mxu0 0.0
        %1093 = vmatprep.subr.mxu0 0.0
        %1094 = vmatpush1.msra.mxu0 0.0
        %1095 = vmatprep.subr.mxu0 0.0
        %1096 = vmatpush1.msra.mxu0 0.0
        %1097 = vmatprep.subr.mxu0 0.0
        %1098 = vmatpush1.msra.mxu0 0.0
        %1099 = vmatprep.subr.mxu0 0.0
        %1100 = vmatpush1.msra.mxu0 0.0
        %1101 = vmatprep.subr.mxu0 0.0
        %1102 = vmatpush1.msra.mxu0 0.0
        %1103 = vmatprep.subr.mxu0 0.0
        %1104 = vmatpush1.msra.mxu0 0.0
        %1105 = vmatprep.subr.mxu0 0.0
        %1106 = vmatpush1.msra.mxu0 0.0
        %1107 = vmatprep.subr.mxu0 0.0
        %1108 = vmatpush1.msra.mxu0 0.0
        %1109 = vmatprep.subr.mxu0 0.0
        %1110 = vmatpush1.msra.mxu0 0.0
        %1111 = vmatprep.subr.mxu0 0.0
        %1112 = vmatpush1.msra.mxu0 0.0
        %1113 = vmatprep.subr.mxu0 0.0
        %1114 = vmatpush1.msra.mxu0 0.0
        %1115 = vmatprep.subr.mxu0 0.0
        %1116 = vmatpush1.msra.mxu0 0.0
        %1117 = vmatprep.subr.mxu0 0.0
        %1118 = vmatpush1.msra.mxu0 0.0
        %1119 = vmatprep.subr.mxu0 0.0
        %1120 = vmatpush1.msra.mxu0 0.0
        %1121 = vmatprep.subr.mxu0 0.0
        %1122 = vmatpush1.msra.mxu0 0.0
        %1123 = vmatprep.subr.mxu0 0.0
        %1124 = vmatpush1.msra.mxu0 0.0
        %1125 = vmatprep.mubr.f32.mxu0 0.0
        %1126 = vmatmul.mubr.f32.gmra.mrb[0].mxu0 %v1056
        %v1127 = vpop.f32.mrb[0].mxu0
        %v1128 = vadd.f32 %v1045, %v1127
        %v1129 = vpop.f32.mrb[0].mxu0
        %v1130 = vadd.f32 %v1047, %v1129
        %1131 = vmatprep.mubr.f32.mxu0 0.0
        %1132 = vmatmul.mubr.f32.gmra.mrb[0].mxu0 %v1059
        %v1133 = vpop.f32.mrb[0].mxu0
        %v1134 = vadd.f32 %v1051, %v1133
        %v1135 = vpop.f32.mrb[0].mxu0
        %v1136 = vadd.f32 %v1053, %v1135
        %1137 = vdwg.mxu0
        %s1138 = scalar_lea.vmem [#allocation6], 16
        %v1139 = vld [vmem:[%s1138] sm:$0xff]
        %v1140 = vld [vmem:[%s1138 + $0x8] sm:$0xff]
        %v1142 = vsel %vm468, %v1139, 0
        %v1145 = vsel %vm468, %v1140, 0
        %1147 = vmatprep.subr.mxu0 %v959
        %1148 = vmatpush1.msra.mxu0 %v958
        %1149 = vmatprep.subr.mxu0 %v961
        %1150 = vmatpush1.msra.mxu0 %v960
        %1151 = vmatprep.subr.mxu0 %v963
        %1152 = vmatpush1.msra.mxu0 %v962
        %1153 = vmatprep.subr.mxu0 %v965
        %1154 = vmatpush1.msra.mxu0 %v964
        %1155 = vmatprep.subr.mxu0 0.0
        %1156 = vmatpush1.msra.mxu0 0.0
        %1157 = vmatprep.subr.mxu0 0.0
        %1158 = vmatpush1.msra.mxu0 0.0
        %1159 = vmatprep.subr.mxu0 0.0
        %1160 = vmatpush1.msra.mxu0 0.0
        %1161 = vmatprep.subr.mxu0 0.0
        %1162 = vmatpush1.msra.mxu0 0.0
        %1163 = vmatprep.subr.mxu0 0.0
        %1164 = vmatpush1.msra.mxu0 0.0
        %1165 = vmatprep.subr.mxu0 0.0
        %1166 = vmatpush1.msra.mxu0 0.0
        %1167 = vmatprep.subr.mxu0 0.0
        %1168 = vmatpush1.msra.mxu0 0.0
        %1169 = vmatprep.subr.mxu0 0.0
        %1170 = vmatpush1.msra.mxu0 0.0
        %1171 = vmatprep.subr.mxu0 0.0
        %1172 = vmatpush1.msra.mxu0 0.0
        %1173 = vmatprep.subr.mxu0 0.0
        %1174 = vmatpush1.msra.mxu0 0.0
        %1175 = vmatprep.subr.mxu0 0.0
        %1176 = vmatpush1.msra.mxu0 0.0
        %1177 = vmatprep.subr.mxu0 0.0
        %1178 = vmatpush1.msra.mxu0 0.0
        %1179 = vmatprep.subr.mxu0 0.0
        %1180 = vmatpush1.msra.mxu0 0.0
        %1181 = vmatprep.subr.mxu0 0.0
        %1182 = vmatpush1.msra.mxu0 0.0
        %1183 = vmatprep.subr.mxu0 0.0
        %1184 = vmatpush1.msra.mxu0 0.0
        %1185 = vmatprep.subr.mxu0 0.0
        %1186 = vmatpush1.msra.mxu0 0.0
        %1187 = vmatprep.subr.mxu0 0.0
        %1188 = vmatpush1.msra.mxu0 0.0
        %1189 = vmatprep.subr.mxu0 0.0
        %1190 = vmatpush1.msra.mxu0 0.0
        %1191 = vmatprep.subr.mxu0 0.0
        %1192 = vmatpush1.msra.mxu0 0.0
        %1193 = vmatprep.subr.mxu0 0.0
        %1194 = vmatpush1.msra.mxu0 0.0
        %1195 = vmatprep.subr.mxu0 0.0
        %1196 = vmatpush1.msra.mxu0 0.0
        %1197 = vmatprep.subr.mxu0 0.0
        %1198 = vmatpush1.msra.mxu0 0.0
        %1199 = vmatprep.subr.mxu0 0.0
        %1200 = vmatpush1.msra.mxu0 0.0
        %1201 = vmatprep.subr.mxu0 0.0
        %1202 = vmatpush1.msra.mxu0 0.0
        %1203 = vmatprep.subr.mxu0 0.0
        %1204 = vmatpush1.msra.mxu0 0.0
        %1205 = vmatprep.subr.mxu0 0.0
        %1206 = vmatpush1.msra.mxu0 0.0
        %1207 = vmatprep.subr.mxu0 0.0
        %1208 = vmatpush1.msra.mxu0 0.0
        %1209 = vmatprep.subr.mxu0 0.0
        %1210 = vmatpush1.msra.mxu0 0.0
        %1211 = vmatprep.mubr.f32.mxu0 0.0
        %1212 = vmatmul.mubr.f32.gmra.mrb[0].mxu0 %v1142
        %v1213 = vpop.f32.mrb[0].mxu0
        %v1214 = vadd.f32 0.0, %v1213
        %v1215 = vpop.f32.mrb[0].mxu0
        %v1216 = vadd.f32 0.0, %v1215
        %1217 = vmatprep.mubr.f32.mxu0 0.0
        %1218 = vmatmul.mubr.f32.gmra.mrb[0].mxu0 %v1145
        %v1219 = vpop.f32.mrb[0].mxu0
        %v1220 = vadd.f32 0.0, %v1219
        %v1221 = vpop.f32.mrb[0].mxu0
        %v1222 = vadd.f32 0.0, %v1221
        %1223 = vdwg.mxu0
        %v1224 = vadd.f32 %v1128, %v1214
        %v1225 = vadd.f32 %v1130, %v1216
        %v1226 = vadd.f32 %v1134, %v1220
        %v1227 = vadd.f32 %v1136, %v1222
        %s1228 = scalar_lea.vmem %s4, 16
        %v1229 = vld [vmem:[%s1228] sm:$0xff]
        %v1230 = vld [vmem:[%s1228 + $0x8] sm:$0xff]
        %1232 = vset.pattern.permute.xlu0 0
        %1233 = vperm.xlu0 %1232, %v1229
        %v1234 = vpop.permute.xlu0 %1233
        %1237 = vset.pattern.permute.xlu0 0
        %1238 = vperm.xlu0 %1237, %v1230
        %v1239 = vpop.permute.xlu0 %1238
        %v1241 = vadd.f32 %v1224, %v1234
        %v1242 = vadd.f32 %v1225, %v1234
        %v1243 = vadd.f32 %v1226, %v1239
        %v1244 = vadd.f32 %v1227, %v1239
        %v1245 = vmul.f32 %v1241, 0.2
        %v1246 = vmul.f32 %v1242, 0.2
        %v1247 = vmul.f32 %v1243, 0.2
        %v1248 = vmul.f32 %v1244, 0.2
        %v1249 = vmax.f32 %v1241, %v1245
        %v1250 = vmax.f32 %v1242, %v1246
        %v1251 = vmax.f32 %v1243, %v1247
        %v1252 = vmax.f32 %v1244, %v1248
        %s1253 = scalar_lea.vmem %s5, 32
        %v1254 = vld [vmem:[%s1253] sm:$0xff]
        %v1255 = vld [vmem:[%s1253 + $0x8] sm:$0xff]
        %v1256 = vld [vmem:[%s1253 + $0x10] sm:$0xff]
        %v1257 = vld [vmem:[%s1253 + $0x18] sm:$0xff]
        %s1258 = scalar_lea.vmem %s6, 32
        %v1259 = vld [vmem:[%s1258] sm:$0xff]
        %v1260 = vld [vmem:[%s1258 + $0x8] sm:$0xff]
        %v1261 = vld [vmem:[%s1258 + $0x10] sm:$0xff]
        %v1262 = vld [vmem:[%s1258 + $0x18] sm:$0xff]
        %1264 = vset.pattern.permute.xlu0 0
        %1265 = vperm.xlu0 %1264, %v1259
        %v1266 = vpop.permute.xlu0 %1265
        %1269 = vset.pattern.permute.xlu0 0
        %1270 = vperm.xlu0 %1269, %v1260
        %v1271 = vpop.permute.xlu0 %1270
        %1274 = vset.pattern.permute.xlu0 0
        %1275 = vperm.xlu0 %1274, %v1261
        %v1276 = vpop.permute.xlu0 %1275
        %1279 = vset.pattern.permute.xlu0 0
        %1280 = vperm.xlu0 %1279, %v1262
        %v1281 = vpop.permute.xlu0 %1280
        %v1284 = vsel %vm776, %v1254, 0
        %v1287 = vsel %vm776, %v1255, 0
        %v1290 = vsel %vm776, %v1256, 0
        %v1293 = vsel %vm776, %v1257, 0
        %1295 = vmatprep.subr.mxu0 %v1250
        %1296 = vmatpush1.msra.mxu0 %v1249
        %1297 = vmatprep.subr.mxu0 %v1252
        %1298 = vmatpush1.msra.mxu0 %v1251
        %1299 = vmatprep.subr.mxu0 0.0
        %1300 = vmatpush1.msra.mxu0 0.0
        %1301 = vmatprep.subr.mxu0 0.0
        %1302 = vmatpush1.msra.mxu0 0.0
        %1303 = vmatprep.subr.mxu0 0.0
        %1304 = vmatpush1.msra.mxu0 0.0
        %1305 = vmatprep.subr.mxu0 0.0
        %1306 = vmatpush1.msra.mxu0 0.0
        %1307 = vmatprep.subr.mxu0 0.0
        %1308 = vmatpush1.msra.mxu0 0.0
        %1309 = vmatprep.subr.mxu0 0.0
        %1310 = vmatpush1.msra.mxu0 0.0
        %1311 = vmatprep.subr.mxu0 0.0
        %1312 = vmatpush1.msra.mxu0 0.0
        %1313 = vmatprep.subr.mxu0 0.0
        %1314 = vmatpush1.msra.mxu0 0.0
        %1315 = vmatprep.subr.mxu0 0.0
        %1316 = vmatpush1.msra.mxu0 0.0
        %1317 = vmatprep.subr.mxu0 0.0
        %1318 = vmatpush1.msra.mxu0 0.0
        %1319 = vmatprep.subr.mxu0 0.0
        %1320 = vmatpush1.msra.mxu0 0.0
        %1321 = vmatprep.subr.mxu0 0.0
        %1322 = vmatpush1.msra.mxu0 0.0
        %1323 = vmatprep.subr.mxu0 0.0
        %1324 = vmatpush1.msra.mxu0 0.0
        %1325 = vmatprep.subr.mxu0 0.0
        %1326 = vmatpush1.msra.mxu0 0.0
        %1327 = vmatprep.subr.mxu0 0.0
        %1328 = vmatpush1.msra.mxu0 0.0
        %1329 = vmatprep.subr.mxu0 0.0
        %1330 = vmatpush1.msra.mxu0 0.0
        %1331 = vmatprep.subr.mxu0 0.0
        %1332 = vmatpush1.msra.mxu0 0.0
        %1333 = vmatprep.subr.mxu0 0.0
        %1334 = vmatpush1.msra.mxu0 0.0
        %1335 = vmatprep.subr.mxu0 0.0
        %1336 = vmatpush1.msra.mxu0 0.0
        %1337 = vmatprep.subr.mxu0 0.0
        %1338 = vmatpush1.msra.mxu0 0.0
        %1339 = vmatprep.subr.mxu0 0.0
        %1340 = vmatpush1.msra.mxu0 0.0
        %1341 = vmatprep.subr.mxu0 0.0
        %1342 = vmatpush1.msra.mxu0 0.0
        %1343 = vmatprep.subr.mxu0 0.0
        %1344 = vmatpush1.msra.mxu0 0.0
        %1345 = vmatprep.subr.mxu0 0.0
        %1346 = vmatpush1.msra.mxu0 0.0
        %1347 = vmatprep.subr.mxu0 0.0
        %1348 = vmatpush1.msra.mxu0 0.0
        %1349 = vmatprep.subr.mxu0 0.0
        %1350 = vmatpush1.msra.mxu0 0.0
        %1351 = vmatprep.subr.mxu0 0.0
        %1352 = vmatpush1.msra.mxu0 0.0
        %1353 = vmatprep.subr.mxu0 0.0
        %1354 = vmatpush1.msra.mxu0 0.0
        %1355 = vmatprep.subr.mxu0 0.0
        %1356 = vmatpush1.msra.mxu0 0.0
        %1357 = vmatprep.subr.mxu0 0.0
        %1358 = vmatpush1.msra.mxu0 0.0
        %1359 = vmatprep.mubr.f32.mxu0 0.0
        %1360 = vmatmul.mubr.f32.gmra.mrb[0].mxu0 %v1284
        %v1361 = vpop.f32.mrb[0].mxu0
        %v1362 = vadd.f32 %v1266, %v1361
        %v1363 = vpop.f32.mrb[0].mxu0
        %v1364 = vadd.f32 %v1266, %v1363
        %1365 = vmatprep.mubr.f32.mxu0 0.0
        %1366 = vmatmul.mubr.f32.gmra.mrb[0].mxu0 %v1287
        %v1367 = vpop.f32.mrb[0].mxu0
        %v1368 = vadd.f32 %v1271, %v1367
        %v1369 = vpop.f32.mrb[0].mxu0
        %v1370 = vadd.f32 %v1271, %v1369
        %1371 = vmatprep.mubr.f32.mxu0 0.0
        %1372 = vmatmul.mubr.f32.gmra.mrb[0].mxu0 %v1290
        %v1373 = vpop.f32.mrb[0].mxu0
        %v1374 = vadd.f32 %v1276, %v1373
        %v1375 = vpop.f32.mrb[0].mxu0
        %v1376 = vadd.f32 %v1276, %v1375
        %1377 = vmatprep.mubr.f32.mxu0 0.0
        %1378 = vmatmul.mubr.f32.gmra.mrb[0].mxu0 %v1293
        %v1379 = vpop.f32.mrb[0].mxu0
        %v1380 = vadd.f32 %v1281, %v1379
        %v1381 = vpop.f32.mrb[0].mxu0
        %v1382 = vadd.f32 %v1281, %v1381
        %1383 = vdwg.mxu0
        %v1384 = vadd.f32 %v878, %v1362
        %v1385 = vadd.f32 %v879, %v1364
        %v1386 = vadd.f32 %v880, %v1368
        %v1387 = vadd.f32 %v881, %v1370
        %v1388 = vadd.f32 %v882, %v1374
        %v1389 = vadd.f32 %v883, %v1376
        %v1390 = vadd.f32 %v884, %v1380
        %v1391 = vadd.f32 %v885, %v1382
        %v1392 = vmul.f32 %v1384, 0.2
        %v1393 = vmul.f32 %v1385, 0.2
        %v1394 = vmul.f32 %v1386, 0.2
        %v1395 = vmul.f32 %v1387, 0.2
        %v1396 = vmul.f32 %v1388, 0.2
        %v1397 = vmul.f32 %v1389, 0.2
        %v1398 = vmul.f32 %v1390, 0.2
        %v1399 = vmul.f32 %v1391, 0.2
        %v1400 = vmax.f32 %v1384, %v1392
        %v1401 = vmax.f32 %v1385, %v1393
        %v1402 = vmax.f32 %v1386, %v1394
        %v1403 = vmax.f32 %v1387, %v1395
        %v1404 = vmax.f32 %v1388, %v1396
        %v1405 = vmax.f32 %v1389, %v1397
        %v1406 = vmax.f32 %v1390, %v1398
        %v1407 = vmax.f32 %v1391, %v1399
        %1408 = vst [vmem:[%s340] sm:$0xff] %v1400
        %1409 = vst [vmem:[%s340 + $0x8] sm:$0xff] %v1401
        %1410 = vst [vmem:[%s340 + $0x10] sm:$0xff] %v1402
        %1411 = vst [vmem:[%s340 + $0x18] sm:$0xff] %v1403
        %1412 = vst [vmem:[%s340 + $0x20] sm:$0xff] %v1404
        %1413 = vst [vmem:[%s340 + $0x28] sm:$0xff] %v1405
        %1414 = vst [vmem:[%s340 + $0x30] sm:$0xff] %v1406
        %1415 = vst [vmem:[%s340 + $0x38] sm:$0xff] %v1407
        %s1416 = sand.u32 %s183, 1
        %s1417 = scalar_lea.sflag [#allocation5], %s1416
        %s1418 = sand.u32 %s183, 1
        %s1419 = smul.addr %s1418, 64
        %s1420 = scalar_lea.vmem [#allocation8], %s1419
        // Predicated region
        $region80: #{tpu_custom_call.1} parent=66 // pred_check
          %p1421 = pneg %p193
        $region81: #{tpu_custom_call.1} parent=66 // pred_check_branch
          %1423 = sbr.rel (%p1421) target = $region83
        $region82: #{tpu_custom_call.1} parent=66 // pred_region
          %s1424 = smul.u32 2, %s23
          %s1426 = ssub.s32 1024, 1024
          %1427 = vsyncadd %s1417, %s1426
          %s1428 = smul.addr %s1424, 128
          %s1429 = scalar_lea.hbm %s7, %s1428
          %s1430 = sshll.u32 %s1420, 4
          %s1431 = int_to_ptr.vmem [resolvable:$true] %s1430
          %1436 = dma.vmem_to_hbm [thread:$0]  %s1431, 1024, %s1429, %s1417, 256, 512, 16
        $region83: #{tpu_custom_call.1} parent=66 // pred_fallthru
          _
      $region67: #{tpu_custom_call.1} parent=5 // pred_fallthru
        _
      %p1437 = scmp.le.s32.totalorder 2, %s18
      // Predicated region
      $region84: #{tpu_custom_call.1} parent=5 // pred_check
        %p1438 = pneg %p1437
      $region85: #{tpu_custom_call.1} parent=5 // pred_check_branch
        %1440 = sbr.rel (%p1438) target = $region87
      $region86: #{tpu_custom_call.1} parent=5 // pred_region
        %s1441 = ssub.s32 %s18, 2
        // Predicated region
        $region88: #{tpu_custom_call.1} parent=86 // pred_check
          %p1442 = pneg %p199
        $region89: #{tpu_custom_call.1} parent=86 // pred_check_branch
          %1444 = sbr.rel (%p1442) target = $region91
        $region90: #{tpu_custom_call.1} parent=86 // pred_region
          %s1445 = sand.u32 %s184, 1
          %s1446 = scalar_lea.sflag [#allocation5], %s1445
          %s1447 = sand.u32 %s184, 1
          %s1448 = smul.addr %s1447, 64
          %s1449 = scalar_lea.vmem [#allocation8], %s1448
          %1450 = dma.done %s1446, 1024
        $region91: #{tpu_custom_call.1} parent=86 // pred_fallthru
          _
      $region87: #{tpu_custom_call.1} parent=5 // pred_fallthru
        _
    $region6: #{tpu_custom_call.1} parent=1 // loop_footer
      %s22 = sadd.s32 1, %s18
    $region7: #{tpu_custom_call.1} parent=1 // loop_footer_branch
      %17 = sbr.rel target = $region3
    $region8: #{tpu_custom_call.1} parent=1 // loop_exit
      _
    %1451 = vsyncpa [#allocation4], 1
    %s1452 = scalar_lea.sflag [#allocation4], 1
    %1453 = vsyncpa %s1452, 1
    %1454 = vsyncpa [#allocation7], 1
    %1455 = vsyncpa [#allocation5], 1
    %s1456 = scalar_lea.sflag [#allocation5], 1
    %1457 = vsyncpa %s1456, 1

</llo_original>
